<compile_context>
chip_gen: v6e
topology: v6e:2x2x1
jax: 0.10.0
libtpu: 0.0.40
codegen_flags: <defaults>
</compile_context>

<pallas_src>
import functools
import math

import jax
import jax.numpy as jnp
from jax.experimental import pallas as pl
from jax.experimental.pallas import tpu as pltpu


# ----------------------------- kernel helpers ------------------------------

def _rmsnorm(x, w, eps):
    # x: (M, D) f32, w: (1, D) f32 -- stays f32 (VPU/EUP path on all gens)
    var = jnp.mean(x * x, axis=-1, keepdims=True)
    return x * jax.lax.rsqrt(var + eps) * w


@functools.lru_cache(maxsize=None)
def _vmem_limit_bytes():
    # Per-generation VMEM budget (review: do not hardcode 32 MiB).
    try:
        cap = int(pltpu.get_tpu_info().vmem_capacity_bytes)
    except Exception:
        cap = 128 * 1024 * 1024
    if cap <= 0:
        cap = 128 * 1024 * 1024
    return (cap * 7) // 8          # ~112 MiB on v5e/v6e, ~56 MiB on v7x


def _inv_spec(block_shape, index_map, single_buffer):
    # Blocks whose index_map is constant along the inner (reduction) grid
    # axis are never re-fetched -> single-buffer them to save VMEM (v7x).
    if single_buffer:
        return pl.BlockSpec(block_shape, index_map, pipeline_mode=pl.Buffered(1))
    return pl.BlockSpec(block_shape, index_map)


# ---------------------- attention kernel (grid = B, H) ----------------------

def attn_kernel(x_ref, cos_ref, sin_ref, ln1_ref, wqkv_ref, wo_ref,
                out_ref, hnorm_scr, *, eps, head_dim):
    h = pl.program_id(1)

    # --- init (once per batch row): input RMSNorm + residual into output ---
    @pl.when(h == 0)
    def _():
        hn = _rmsnorm(x_ref[0], ln1_ref[...], eps)         # f32 elementwise
        hnorm_scr[...] = hn.astype(jnp.bfloat16)            # bf16 feeds the MXU
        out_ref[0] = x_ref[0]                                # residual init

    hn = hnorm_scr[...]                                      # (S, D) bf16

    # --- fused QKV projection (1/sqrt(Dh) already folded into the Q slab) ---
    qkv = jnp.dot(hn, wqkv_ref[...],
                  preferred_element_type=jnp.float32)        # (S, 3*Dh) f32
    q = qkv[:, :head_dim]
    k = qkv[:, head_dim:2 * head_dim]
    v = qkv[:, 2 * head_dim:]

    # --- RoPE: rotate_half via lane roll, sign folded into the sin table ---
    cos = cos_ref[...]                                       # (S, Dh) f32 shared
    sin = sin_ref[...]                                       # first half negated
    half = head_dim // 2
    q = q * cos + pltpu.roll(q, shift=half, axis=1) * sin
    k = k * cos + pltpu.roll(k, shift=half, axis=1) * sin

    # --- causal softmax (f32 scores; attn_mask=None prefill path) ---
    s = jax.lax.dot_general(q.astype(jnp.bfloat16), k.astype(jnp.bfloat16),
                            (((1,), (1,)), ((), ())),
                            preferred_element_type=jnp.float32)   # (S, S)
    seq = s.shape[0]
    row = jax.lax.broadcasted_iota(jnp.int32, (seq, seq), 0)
    col = jax.lax.broadcasted_iota(jnp.int32, (seq, seq), 1)
    s = jnp.where(col <= row, s, jnp.float32(-1e30))
    p = jnp.exp(s - jnp.max(s, axis=-1, keepdims=True))
    denom = jnp.sum(p, axis=-1, keepdims=True)               # (S, 1)

    ctx = jnp.dot(p.astype(jnp.bfloat16), v.astype(jnp.bfloat16),
                  preferred_element_type=jnp.float32)        # (S, Dh)
    # normalize the small (S,Dh) ctx instead of the (S,S) probabilities
    ctx = ctx * pl.reciprocal(denom, approx=True)

    # --- accumulate this head's WO contribution into the resident output ---
    out_ref[0] += jnp.dot(ctx.astype(jnp.bfloat16), wo_ref[...],
                          preferred_element_type=jnp.float32)


# ------------- MLP kernel (flattened tokens, grid = M/tile_m, nk) -----------

def mlp_kernel(h1_ref, ln2_ref, wg_ref, wu_ref, wd_ref, lnf_ref,
               o_ref, h2_scr, *, eps, fuse_final):
    k = pl.program_id(1)
    nk = pl.num_programs(1)

    # --- init: post-attention RMSNorm + residual into output ---
    @pl.when(k == 0)
    def _():
        h2 = _rmsnorm(h1_ref[...], ln2_ref[...], eps)
        h2_scr[...] = h2.astype(jnp.bfloat16)
        o_ref[...] = h1_ref[...]                             # residual init

    h2 = h2_scr[...]                                          # (tile_m, D) bf16

    # --- SwiGLU on this intermediate-dim slab ---
    gate = jnp.dot(h2, wg_ref[...], preferred_element_type=jnp.float32)
    up = jnp.dot(h2, wu_ref[...], preferred_element_type=jnp.float32)
    # TODO(synk): on v6e/v7x compute silu(gate)*up in bf16 (bf16 VPU/EUP path).
    act = jax.nn.silu(gate) * up                              # f32 elementwise
    o_ref[...] += jnp.dot(act.astype(jnp.bfloat16), wd_ref[...],
                          preferred_element_type=jnp.float32)

    # --- fused final RMSNorm (only on the last layer, last slab) ---
    if fuse_final:
        @pl.when(k == nk - 1)
        def _():
            o_ref[...] = _rmsnorm(o_ref[...], lnf_ref[...], eps)


# ------------------------------- wrappers -----------------------------------

def attn_forward(x, cos, sin, p, *, eps, single_buffer):
    B, S, D = x.shape
    H, _, three_dh = p["wqkv"].shape
    Dh = three_dh // 3
    kern = functools.partial(attn_kernel, eps=eps, head_dim=Dh)
    return pl.pallas_call(
        kern,
        out_shape=jax.ShapeDtypeStruct((B, S, D), jnp.float32),
        grid_spec=pltpu.PrefetchScalarGridSpec(
            num_scalar_prefetch=0,
            grid=(B, H),
            in_specs=[
                _inv_spec((1, S, D), lambda b, h: (b, 0, 0), single_buffer),  # x
                _inv_spec((S, Dh), lambda b, h: (0, 0), single_buffer),       # cos
                _inv_spec((S, Dh), lambda b, h: (0, 0), single_buffer),       # sin(signed)
                _inv_spec((1, D), lambda b, h: (0, 0), single_buffer),        # ln1
                pl.BlockSpec((None, D, 3 * Dh), lambda b, h: (h, 0, 0)),      # wqkv[h]
                pl.BlockSpec((None, Dh, D), lambda b, h: (h, 0, 0)),          # wo[h]
            ],
            out_specs=pl.BlockSpec((1, S, D), lambda b, h: (b, 0, 0)),
            scratch_shapes=[pltpu.VMEM((S, D), jnp.bfloat16)],   # RMSNorm(x)
        ),
        compiler_params=pltpu.CompilerParams(
            dimension_semantics=("parallel", "arbitrary"),
            vmem_limit_bytes=_vmem_limit_bytes()),
    )(x, cos, sin, p["ln1"], p["wqkv"], p["wo"])


def mlp_forward(h1, p, final_norm_w, *, eps, tile_i, tile_m, fuse_final,
                single_buffer):
    B, S, D = h1.shape
    M = B * S
    h1f = h1.reshape(M, D)                      # flatten tokens: amortize
    I = p["wg"].shape[1]                        # weight DMA over tile_m tokens
    tile_m = min(tile_m, M)
    tile_i = min(tile_i, I)
    assert M % tile_m == 0 and I % tile_i == 0
    nk = I // tile_i
    kern = functools.partial(mlp_kernel, eps=eps, fuse_final=fuse_final)
    out = pl.pallas_call(
        kern,
        out_shape=jax.ShapeDtypeStruct((M, D), jnp.float32),
        grid_spec=pltpu.PrefetchScalarGridSpec(
            num_scalar_prefetch=0,
            grid=(M // tile_m, nk),
            in_specs=[
                _inv_spec((tile_m, D), lambda m, k: (m, 0), single_buffer),   # h1
                _inv_spec((1, D), lambda m, k: (0, 0), single_buffer),        # ln2
                pl.BlockSpec((D, tile_i), lambda m, k: (0, k)),               # wg slab
                pl.BlockSpec((D, tile_i), lambda m, k: (0, k)),               # wu slab
                pl.BlockSpec((tile_i, D), lambda m, k: (k, 0)),               # wd slab
                _inv_spec((1, D), lambda m, k: (0, 0), single_buffer),        # final norm
            ],
            out_specs=pl.BlockSpec((tile_m, D), lambda m, k: (m, 0)),
            scratch_shapes=[pltpu.VMEM((tile_m, D), jnp.bfloat16)],  # RMSNorm(h1)
        ),
        compiler_params=pltpu.CompilerParams(
            dimension_semantics=("parallel", "arbitrary"),
            vmem_limit_bytes=_vmem_limit_bytes()),
    )(h1f, p["ln2"], p["wg"], p["wu"], p["wd"], final_norm_w)
    return out.reshape(B, S, D)


def rotary_tables(pos, head_dim, base):
    # plain-JAX glue (RotaryEmbedding precompute); shared across batch.
    inv_freq = 1.0 / (base ** (jnp.arange(0, head_dim, 2,
                                          dtype=jnp.float32) / head_dim))
    angles = pos.astype(jnp.float32)[:, None] * inv_freq[None, :]  # (S, Dh/2)
    cos = jnp.concatenate([jnp.cos(angles), jnp.cos(angles)], axis=-1)
    # rotate_half's sign folded into the sin table:
    #   rotate_half(q) * sin == roll(q, Dh/2) * concat([-sin, sin])
    sin_signed = jnp.concatenate([-jnp.sin(angles), jnp.sin(angles)], axis=-1)
    return cos, sin_signed


def transformer_forward(tokens, params, cfg):
    B, S = tokens.shape
    # embedding lookup is a gather -> plain JAX glue
    x = jnp.take(params["embed"], tokens, axis=0)                  # (B, S, D) f32
    pos = jnp.arange(S, dtype=jnp.int32)
    cos, sin = rotary_tables(pos, cfg["head_dim"], cfg["rope_theta"])
    n_layers = len(params["layers"])
    sb = cfg.get("single_buffer_invariants", True)
    # TODO(synk): at production S, add a query-tile grid axis with online
    # (flash) softmax instead of the full (S,S) score tile (also feeds v7x's
    # 2nd TensorCore at small B); block several batch rows per attention grid
    # step / group 2 heads per step to amortize weight DMA and widen the WO
    # contraction; carry the residual stream between kernels in bf16; (v7x)
    # store MLP/QKV weights as fp8 with per-channel scales.
    for i, lp in enumerate(params["layers"]):
        h1 = attn_forward(x, cos, sin, lp, eps=cfg["eps"], single_buffer=sb)
        x = mlp_forward(h1, lp, params["final_norm"], eps=cfg["eps"],
                        tile_i=cfg["tile_i"], tile_m=cfg["tile_m"],
                        fuse_final=(i == n_layers - 1), single_buffer=sb)
    # num_chunks is None (no chunked CE) -> return full tensor
    return x


# ------------------------------ param init ----------------------------------

def init_params(key, cfg):
    V, D, I, L = cfg["vocab"], cfg["hidden"], cfg["intermediate"], cfg["layers"]
    H, Dh = cfg["num_heads"], cfg["head_dim"]
    assert H * Dh == D
    qk_scale = 1.0 / math.sqrt(Dh)
    keys = jax.random.split(key, 1 + 7 * L)
    std = 0.02
    embed = std * jax.random.normal(keys[0], (V, D), jnp.float32)
    embed = embed.at[cfg["pad_token"]].set(0.0)                    # padding_idx
    layers = []
    ki = 1
    for _ in range(L):
        wq = std * jax.random.normal(keys[ki + 0], (D, D), jnp.float32)
        wk = std * jax.random.normal(keys[ki + 1], (D, D), jnp.float32)
        wv = std * jax.random.normal(keys[ki + 2], (D, D), jnp.float32)
        wo = std * jax.random.normal(keys[ki + 3], (D, D), jnp.float32)
        # per-head layout [H, D, Dh]; 1/sqrt(Dh) folded into the Q slab so the
        # kernel never scales the (S,S) score tile (same softmax semantics).
        wq_h = wq.reshape(D, H, Dh).transpose(1, 0, 2) * qk_scale
        wk_h = wk.reshape(D, H, Dh).transpose(1, 0, 2)
        wv_h = wv.reshape(D, H, Dh).transpose(1, 0, 2)
        wqkv = jnp.concatenate([wq_h, wk_h, wv_h], axis=-1)        # (H, D, 3*Dh)
        layers.append(dict(
            ln1=jnp.ones((1, D), jnp.float32),
            wqkv=wqkv.astype(jnp.bfloat16),
            wo=wo.reshape(H, Dh, D).astype(jnp.bfloat16),
            ln2=jnp.ones((1, D), jnp.float32),
            wg=(std * jax.random.normal(keys[ki + 4], (D, I),
                                        jnp.float32)).astype(jnp.bfloat16),
            wu=(std * jax.random.normal(keys[ki + 5], (D, I),
                                        jnp.float32)).astype(jnp.bfloat16),
            wd=(std * jax.random.normal(keys[ki + 6], (I, D),
                                        jnp.float32)).astype(jnp.bfloat16),
        ))
        ki += 7
    final_norm = jnp.ones((1, D), jnp.float32)
    return dict(embed=embed, layers=layers, final_norm=final_norm)


# --------------------------------- main --------------------------------------

if __name__ == "__main__":
    # Small test shapes; head_dim kept at 128 so all lane slices / rolls are
    # 128-aligned (prod-like).  At prod use tile_i=512 (v6e) / 256-512 (v7x).
    cfg = dict(vocab=64, hidden=256, num_heads=2, head_dim=128,
               intermediate=512, tile_i=256, tile_m=256, layers=2,
               rope_theta=10000.0, eps=1e-6, pad_token=0,
               single_buffer_invariants=True)
    B, S = 2, 8

    key = jax.random.PRNGKey(0)
    k_params, k_tok = jax.random.split(key)
    params = init_params(k_params, cfg)
    tokens = jax.random.randint(k_tok, (B, S), 0, cfg["vocab"], dtype=jnp.int32)

    try:
        out = transformer_forward(tokens, params, cfg)
    except Exception:
        # Graceful fallback: if this runtime rejects single-buffered
        # (pl.Buffered(1)) grid-invariant blocks, retry double-buffered.
        cfg["single_buffer_invariants"] = False
        out = transformer_forward(tokens, params, cfg)
    jax.block_until_ready(out)
    assert out.shape == (B, S, cfg["hidden"])
    assert bool(jnp.all(jnp.isfinite(out)))
    # TODO(synk): KV-cache (past_kv) / padding attn_mask branches are not
    # exercised (inference-time prefill with attn_mask=None path only).
    print("KERNEL_OK")
</pallas_src>

<mosaic_0001>
module attributes {stable_mosaic.version = 11 : i64} {
  func.func @attn_kernel(%arg0: i32, %arg1: i32, %arg2: memref<1x8x256xf32, #tpu.memory_space<vmem>>, %arg3: memref<8x128xf32, #tpu.memory_space<vmem>>, %arg4: memref<8x128xf32, #tpu.memory_space<vmem>>, %arg5: memref<1x256xf32, #tpu.memory_space<vmem>>, %arg6: memref<1x256x384xbf16, #tpu.memory_space<vmem>>, %arg7: memref<1x128x256xbf16, #tpu.memory_space<vmem>>, %arg8: memref<1x8x256xf32, #tpu.memory_space<vmem>>, %arg9: memref<8x256xbf16, #tpu.memory_space<vmem>>) attributes {dimension_semantics = [#tpu.dimension_semantics<parallel>, #tpu.dimension_semantics<arbitrary>], iteration_bounds = array<i64: 2, 2>, scalar_prefetch = 0 : i64, scratch_operands = 1 : i64, tpu.core_type = #tpu.core_type<tc>, window_params = [{pipeline_mode = #tpu.pipeline_mode<synchronous>, transform_indices = @transform_0, window_bounds = array<i64: 1, 8, 256>}, {pipeline_mode = #tpu.pipeline_mode<synchronous>, transform_indices = @transform_1, window_bounds = array<i64: 8, 128>}, {pipeline_mode = #tpu.pipeline_mode<synchronous>, transform_indices = @transform_2, window_bounds = array<i64: 8, 128>}, {pipeline_mode = #tpu.pipeline_mode<synchronous>, transform_indices = @transform_3, window_bounds = array<i64: 1, 256>}, {transform_indices = @transform_4, window_bounds = array<i64: 1, 256, 384>}, {transform_indices = @transform_5, window_bounds = array<i64: 1, 128, 256>}, {transform_indices = @transform_6, window_bounds = array<i64: 1, 8, 256>}]} {
    %c0_i32 = arith.constant 0 : i32
    %0 = arith.cmpi eq, %arg1, %c0_i32 : i32
    %1 = arith.extui %0 : i1 to i32
    %c0_i32_0 = arith.constant 0 : i32
    %2 = arith.cmpi ne, %1, %c0_i32_0 : i32
    scf.if %2 {
      %c0_25 = arith.constant 0 : index
      %c0_26 = arith.constant 0 : index
      %c0_27 = arith.constant 0 : index
      %51 = vector.load %arg2[%c0_25, %c0_26, %c0_27] : memref<1x8x256xf32, #tpu.memory_space<vmem>>, vector<1x8x256xf32>
      %52 = vector.shape_cast %51 : vector<1x8x256xf32> to vector<8x256xf32>
      %c0_28 = arith.constant 0 : index
      %c0_29 = arith.constant 0 : index
      %53 = vector.load %arg5[%c0_28, %c0_29] : memref<1x256xf32, #tpu.memory_space<vmem>>, vector<1x256xf32>
      %54 = arith.mulf %52, %52 : vector<8x256xf32>
      %cst_30 = arith.constant dense<0.000000e+00> : vector<8xf32>
      %55 = vector.multi_reduction <add>, %54, %cst_30 [1] : vector<8x256xf32> to vector<8xf32>
      %56 = vector.shape_cast %55 : vector<8xf32> to vector<8x1xf32>
      %cst_31 = arith.constant 2.560000e+02 : f32
      %57 = vector.broadcast %cst_31 : f32 to vector<8x1xf32>
      %58 = arith.divf %56, %57 : vector<8x1xf32>
      %cst_32 = arith.constant 9.99999997E-7 : f32
      %59 = vector.broadcast %cst_32 : f32 to vector<8x1xf32>
      %60 = arith.addf %58, %59 : vector<8x1xf32>
      %61 = math.rsqrt %60 : vector<8x1xf32>
      %62 = vector.broadcast %61 : vector<8x1xf32> to vector<8x256xf32>
      %63 = arith.mulf %52, %62 : vector<8x256xf32>
      %64 = vector.broadcast %53 : vector<1x256xf32> to vector<8x256xf32>
      %65 = arith.mulf %63, %64 : vector<8x256xf32>
      %66 = arith.truncf %65 : vector<8x256xf32> to vector<8x256xbf16>
      %c0_33 = arith.constant 0 : index
      %c0_34 = arith.constant 0 : index
      %67 = vector.load %arg9[%c0_33, %c0_34] : memref<8x256xbf16, #tpu.memory_space<vmem>>, vector<8x256xbf16>
      tpu.vector_store %arg9[%c0_33, %c0_34], %66 {strides = array<i32>} : memref<8x256xbf16, #tpu.memory_space<vmem>>, vector<8x256xbf16>,
      %c0_35 = arith.constant 0 : index
      %c0_36 = arith.constant 0 : index
      %c0_37 = arith.constant 0 : index
      %68 = vector.load %arg2[%c0_35, %c0_36, %c0_37] : memref<1x8x256xf32, #tpu.memory_space<vmem>>, vector<1x8x256xf32>
      %69 = vector.shape_cast %68 : vector<1x8x256xf32> to vector<8x256xf32>
      %c0_38 = arith.constant 0 : index
      %c0_39 = arith.constant 0 : index
      %c0_40 = arith.constant 0 : index
      %70 = vector.load %arg8[%c0_38, %c0_39, %c0_40] : memref<1x8x256xf32, #tpu.memory_space<vmem>>, vector<1x8x256xf32>
      %71 = vector.shape_cast %70 : vector<1x8x256xf32> to vector<8x256xf32>
      %72 = vector.shape_cast %69 : vector<8x256xf32> to vector<1x8x256xf32>
      tpu.vector_store %arg8[%c0_38, %c0_39, %c0_40], %72 {strides = array<i32>} : memref<1x8x256xf32, #tpu.memory_space<vmem>>, vector<1x8x256xf32>,
    } else {
    }
    %c0 = arith.constant 0 : index
    %c0_1 = arith.constant 0 : index
    %3 = vector.load %arg9[%c0, %c0_1] : memref<8x256xbf16, #tpu.memory_space<vmem>>, vector<8x256xbf16>
    %c0_2 = arith.constant 0 : index
    %c0_3 = arith.constant 0 : index
    %c0_4 = arith.constant 0 : index
    %4 = vector.load %arg6[%c0_2, %c0_3, %c0_4] : memref<1x256x384xbf16, #tpu.memory_space<vmem>>, vector<1x256x384xbf16>
    %5 = vector.shape_cast %4 : vector<1x256x384xbf16> to vector<256x384xbf16>
    %cst = arith.constant dense<0.000000e+00> : vector<8x384xf32>
    %6 = tpu.matmul %3, %5, %cst {dimension_numbers = #tpu.dot_dimension_numbers<[1], [0], [0], [1], [0, 0, 1, 1], [], []>} : vector<8x256xbf16>, vector<256x384xbf16>, vector<8x384xf32> -> vector<8x384xf32>
    %7 = vector.extract_strided_slice %6 {offsets = [0, 0], sizes = [8, 128], strides = [1, 1]} : vector<8x384xf32> to vector<8x128xf32>
    %8 = vector.extract_strided_slice %6 {offsets = [0, 128], sizes = [8, 128], strides = [1, 1]} : vector<8x384xf32> to vector<8x128xf32>
    %9 = vector.extract_strided_slice %6 {offsets = [0, 256], sizes = [8, 128], strides = [1, 1]} : vector<8x384xf32> to vector<8x128xf32>
    %c0_5 = arith.constant 0 : index
    %c0_6 = arith.constant 0 : index
    %10 = vector.load %arg3[%c0_5, %c0_6] : memref<8x128xf32, #tpu.memory_space<vmem>>, vector<8x128xf32>
    %c0_7 = arith.constant 0 : index
    %c0_8 = arith.constant 0 : index
    %11 = vector.load %arg4[%c0_7, %c0_8] : memref<8x128xf32, #tpu.memory_space<vmem>>, vector<8x128xf32>
    %12 = arith.mulf %7, %10 : vector<8x128xf32>
    %c64_i32 = arith.constant 64 : i32
    %13 = tpu.dynamic_rotate %7 by %c64_i32 dim 1 : vector<8x128xf32>, i32 -> vector<8x128xf32>
    %14 = arith.mulf %13, %11 : vector<8x128xf32>
    %15 = arith.addf %12, %14 : vector<8x128xf32>
    %16 = arith.mulf %8, %10 : vector<8x128xf32>
    %c64_i32_9 = arith.constant 64 : i32
    %17 = tpu.dynamic_rotate %8 by %c64_i32_9 dim 1 : vector<8x128xf32>, i32 -> vector<8x128xf32>
    %18 = arith.mulf %17, %11 : vector<8x128xf32>
    %19 = arith.addf %16, %18 : vector<8x128xf32>
    %20 = arith.truncf %15 : vector<8x128xf32> to vector<8x128xbf16>
    %21 = arith.truncf %19 : vector<8x128xf32> to vector<8x128xbf16>
    %cst_10 = arith.constant dense<0.000000e+00> : vector<8x8xf32>
    %22 = tpu.matmul %20, %21, %cst_10 {dimension_numbers = #tpu.dot_dimension_numbers<[1], [1], [0], [0], [0, 0, 1, 0], [], []>} : vector<8x128xbf16>, vector<8x128xbf16>, vector<8x8xf32> -> vector<8x8xf32>
    %23 = tpu.iota {dimensions = array<i32: 0>} : vector<8x8xi32>
    %24 = tpu.iota {dimensions = array<i32: 1>} : vector<8x8xi32>
    %25 = arith.cmpi sle, %24, %23 : vector<8x8xi32>
    %cst_11 = arith.constant -1.000000e+30 : f32
    %26 = vector.broadcast %cst_11 : f32 to vector<8x8xf32>
    %27 = arith.select %25, %22, %26 : vector<8x8xi1>, vector<8x8xf32>
    %cst_12 = arith.constant dense<0xFF800000> : vector<8xf32>
    %28 = vector.multi_reduction <maximumf>, %27, %cst_12 [1] : vector<8x8xf32> to vector<8xf32>
    %29 = vector.shape_cast %28 : vector<8xf32> to vector<8x1xf32>
    %30 = vector.broadcast %29 : vector<8x1xf32> to vector<8x8xf32>
    %31 = arith.subf %27, %30 : vector<8x8xf32>
    %32 = math.exp %31 : vector<8x8xf32>
    %cst_13 = arith.constant dense<0.000000e+00> : vector<8xf32>
    %33 = vector.multi_reduction <add>, %32, %cst_13 [1] : vector<8x8xf32> to vector<8xf32>
    %34 = vector.shape_cast %33 : vector<8xf32> to vector<8x1xf32>
    %35 = arith.truncf %32 : vector<8x8xf32> to vector<8x8xbf16>
    %36 = arith.truncf %9 : vector<8x128xf32> to vector<8x128xbf16>
    %cst_14 = arith.constant dense<0.000000e+00> : vector<8x128xf32>
    %37 = tpu.matmul %35, %36, %cst_14 {dimension_numbers = #tpu.dot_dimension_numbers<[1], [0], [0], [1], [0, 0, 1, 1], [], []>} : vector<8x8xbf16>, vector<8x128xbf16>, vector<8x128xf32> -> vector<8x128xf32>
    %38 = tpu.reciprocal %34 {approx = true} : vector<8x1xf32> -> vector<8x1xf32>
    %39 = vector.broadcast %38 : vector<8x1xf32> to vector<8x128xf32>
    %40 = arith.mulf %37, %39 : vector<8x128xf32>
    %c0_15 = arith.constant 0 : index
    %c0_16 = arith.constant 0 : index
    %c0_17 = arith.constant 0 : index
    %41 = vector.load %arg8[%c0_15, %c0_16, %c0_17] : memref<1x8x256xf32, #tpu.memory_space<vmem>>, vector<1x8x256xf32>
    %42 = vector.shape_cast %41 : vector<1x8x256xf32> to vector<8x256xf32>
    %43 = arith.truncf %40 : vector<8x128xf32> to vector<8x128xbf16>
    %c0_18 = arith.constant 0 : index
    %c0_19 = arith.constant 0 : index
    %c0_20 = arith.constant 0 : index
    %44 = vector.load %arg7[%c0_18, %c0_19, %c0_20] : memref<1x128x256xbf16, #tpu.memory_space<vmem>>, vector<1x128x256xbf16>
    %45 = vector.shape_cast %44 : vector<1x128x256xbf16> to vector<128x256xbf16>
    %cst_21 = arith.constant dense<0.000000e+00> : vector<8x256xf32>
    %46 = tpu.matmul %43, %45, %cst_21 {dimension_numbers = #tpu.dot_dimension_numbers<[1], [0], [0], [1], [0, 0, 1, 1], [], []>} : vector<8x128xbf16>, vector<128x256xbf16>, vector<8x256xf32> -> vector<8x256xf32>
    %47 = arith.addf %42, %46 : vector<8x256xf32>
    %c0_22 = arith.constant 0 : index
    %c0_23 = arith.constant 0 : index
    %c0_24 = arith.constant 0 : index
    %48 = vector.load %arg8[%c0_22, %c0_23, %c0_24] : memref<1x8x256xf32, #tpu.memory_space<vmem>>, vector<1x8x256xf32>
    %49 = vector.shape_cast %48 : vector<1x8x256xf32> to vector<8x256xf32>
    %50 = vector.shape_cast %47 : vector<8x256xf32> to vector<1x8x256xf32>
    tpu.vector_store %arg8[%c0_22, %c0_23, %c0_24], %50 {strides = array<i32>} : memref<1x8x256xf32, #tpu.memory_space<vmem>>, vector<1x8x256xf32>,
    return
  }
  func.func @transform_0(%arg0: i32, %arg1: i32) -> (i32, i32, i32) {
    %c0_i32 = arith.constant 0 : i32
    %c0_i32_0 = arith.constant 0 : i32
    %c0_i32_1 = arith.constant 0 : i32
    return %arg0, %c0_i32, %c0_i32_0 : i32, i32, i32
  }
  func.func @transform_1(%arg0: i32, %arg1: i32) -> (i32, i32) {
    %c0_i32 = arith.constant 0 : i32
    %c0_i32_0 = arith.constant 0 : i32
    %c0_i32_1 = arith.constant 0 : i32
    return %c0_i32, %c0_i32_0 : i32, i32
  }
  func.func @transform_2(%arg0: i32, %arg1: i32) -> (i32, i32) {
    %c0_i32 = arith.constant 0 : i32
    %c0_i32_0 = arith.constant 0 : i32
    %c0_i32_1 = arith.constant 0 : i32
    return %c0_i32, %c0_i32_0 : i32, i32
  }
  func.func @transform_3(%arg0: i32, %arg1: i32) -> (i32, i32) {
    %c0_i32 = arith.constant 0 : i32
    %c0_i32_0 = arith.constant 0 : i32
    %c0_i32_1 = arith.constant 0 : i32
    return %c0_i32, %c0_i32_0 : i32, i32
  }
  func.func @transform_4(%arg0: i32, %arg1: i32) -> (i32, i32, i32) {
    %c0_i32 = arith.constant 0 : i32
    %c0_i32_0 = arith.constant 0 : i32
    %c0_i32_1 = arith.constant 0 : i32
    return %arg1, %c0_i32, %c0_i32_0 : i32, i32, i32
  }
  func.func @transform_5(%arg0: i32, %arg1: i32) -> (i32, i32, i32) {
    %c0_i32 = arith.constant 0 : i32
    %c0_i32_0 = arith.constant 0 : i32
    %c0_i32_1 = arith.constant 0 : i32
    return %arg1, %c0_i32, %c0_i32_0 : i32, i32, i32
  }
  func.func @transform_6(%arg0: i32, %arg1: i32) -> (i32, i32, i32) {
    %c0_i32 = arith.constant 0 : i32
    %c0_i32_0 = arith.constant 0 : i32
    %c0_i32_1 = arith.constant 0 : i32
    return %arg0, %c0_i32, %c0_i32_0 : i32, i32, i32
  }
}

module attributes {stable_mosaic.version = 11 : i64} {
  func.func @attn_kernel(%arg0: i32, %arg1: i32, %arg2: memref<1x8x256xf32, #tpu.memory_space<vmem>>, %arg3: memref<8x128xf32, #tpu.memory_space<vmem>>, %arg4: memref<8x128xf32, #tpu.memory_space<vmem>>, %arg5: memref<1x256xf32, #tpu.memory_space<vmem>>, %arg6: memref<1x256x384xbf16, #tpu.memory_space<vmem>>, %arg7: memref<1x128x256xbf16, #tpu.memory_space<vmem>>, %arg8: memref<1x8x256xf32, #tpu.memory_space<vmem>>, %arg9: memref<8x256xbf16, #tpu.memory_space<vmem>>) attributes {dimension_semantics = [#tpu.dimension_semantics<parallel>, #tpu.dimension_semantics<arbitrary>], iteration_bounds = array<i64: 2, 2>, scalar_prefetch = 0 : i64, scratch_operands = 1 : i64, tpu.core_type = #tpu.core_type<tc>, window_params = [{transform_indices = @transform_0, window_bounds = array<i64: 1, 8, 256>}, {pipeline_mode = #tpu.pipeline_mode<synchronous>, transform_indices = @transform_1, window_bounds = array<i64: 8, 128>}, {pipeline_mode = #tpu.pipeline_mode<synchronous>, transform_indices = @transform_2, window_bounds = array<i64: 8, 128>}, {pipeline_mode = #tpu.pipeline_mode<synchronous>, transform_indices = @transform_3, window_bounds = array<i64: 1, 256>}, {transform_indices = @transform_4, window_bounds = array<i64: 1, 256, 384>}, {transform_indices = @transform_5, window_bounds = array<i64: 1, 128, 256>}, {transform_indices = @transform_6, window_bounds = array<i64: 1, 8, 256>}]} {
    %c0_i32 = arith.constant 0 : i32
    %0 = arith.cmpi eq, %arg1, %c0_i32 : i32
    %1 = arith.extui %0 : i1 to i32
    %c0_i32_0 = arith.constant 0 : i32
    %2 = arith.cmpi ne, %1, %c0_i32_0 : i32
    scf.if %2 {
      %c0_25 = arith.constant 0 : index
      %c0_26 = arith.constant 0 : index
      %c0_27 = arith.constant 0 : index
      %51 = vector.load %arg2[%c0_25, %c0_26, %c0_27] : memref<1x8x256xf32, #tpu.memory_space<vmem>>, vector<1x8x256xf32>
      %52 = vector.shape_cast %51 : vector<1x8x256xf32> to vector<8x256xf32>
      %c0_28 = arith.constant 0 : index
      %c0_29 = arith.constant 0 : index
      %53 = vector.load %arg5[%c0_28, %c0_29] : memref<1x256xf32, #tpu.memory_space<vmem>>, vector<1x256xf32>
      %54 = arith.mulf %52, %52 : vector<8x256xf32>
      %cst_30 = arith.constant dense<0.000000e+00> : vector<8xf32>
      %55 = vector.multi_reduction <add>, %54, %cst_30 [1] : vector<8x256xf32> to vector<8xf32>
      %56 = vector.shape_cast %55 : vector<8xf32> to vector<8x1xf32>
      %cst_31 = arith.constant 2.560000e+02 : f32
      %57 = vector.broadcast %cst_31 : f32 to vector<8x1xf32>
      %58 = arith.divf %56, %57 : vector<8x1xf32>
      %cst_32 = arith.constant 9.99999997E-7 : f32
      %59 = vector.broadcast %cst_32 : f32 to vector<8x1xf32>
      %60 = arith.addf %58, %59 : vector<8x1xf32>
      %61 = math.rsqrt %60 : vector<8x1xf32>
      %62 = vector.broadcast %61 : vector<8x1xf32> to vector<8x256xf32>
      %63 = arith.mulf %52, %62 : vector<8x256xf32>
      %64 = vector.broadcast %53 : vector<1x256xf32> to vector<8x256xf32>
      %65 = arith.mulf %63, %64 : vector<8x256xf32>
      %66 = arith.truncf %65 : vector<8x256xf32> to vector<8x256xbf16>
      %c0_33 = arith.constant 0 : index
      %c0_34 = arith.constant 0 : index
      %67 = vector.load %arg9[%c0_33, %c0_34] : memref<8x256xbf16, #tpu.memory_space<vmem>>, vector<8x256xbf16>
      tpu.vector_store %arg9[%c0_33, %c0_34], %66 {strides = array<i32>} : memref<8x256xbf16, #tpu.memory_space<vmem>>, vector<8x256xbf16>,
      %c0_35 = arith.constant 0 : index
      %c0_36 = arith.constant 0 : index
      %c0_37 = arith.constant 0 : index
      %68 = vector.load %arg2[%c0_35, %c0_36, %c0_37] : memref<1x8x256xf32, #tpu.memory_space<vmem>>, vector<1x8x256xf32>
      %69 = vector.shape_cast %68 : vector<1x8x256xf32> to vector<8x256xf32>
      %c0_38 = arith.constant 0 : index
      %c0_39 = arith.constant 0 : index
      %c0_40 = arith.constant 0 : index
      %70 = vector.load %arg8[%c0_38, %c0_39, %c0_40] : memref<1x8x256xf32, #tpu.memory_space<vmem>>, vector<1x8x256xf32>
      %71 = vector.shape_cast %70 : vector<1x8x256xf32> to vector<8x256xf32>
      %72 = vector.shape_cast %69 : vector<8x256xf32> to vector<1x8x256xf32>
      tpu.vector_store %arg8[%c0_38, %c0_39, %c0_40], %72 {strides = array<i32>} : memref<1x8x256xf32, #tpu.memory_space<vmem>>, vector<1x8x256xf32>,
    } else {
    }
    %c0 = arith.constant 0 : index
    %c0_1 = arith.constant 0 : index
    %3 = vector.load %arg9[%c0, %c0_1] : memref<8x256xbf16, #tpu.memory_space<vmem>>, vector<8x256xbf16>
    %c0_2 = arith.constant 0 : index
    %c0_3 = arith.constant 0 : index
    %c0_4 = arith.constant 0 : index
    %4 = vector.load %arg6[%c0_2, %c0_3, %c0_4] : memref<1x256x384xbf16, #tpu.memory_space<vmem>>, vector<1x256x384xbf16>
    %5 = vector.shape_cast %4 : vector<1x256x384xbf16> to vector<256x384xbf16>
    %cst = arith.constant dense<0.000000e+00> : vector<8x384xf32>
    %6 = tpu.matmul %3, %5, %cst {dimension_numbers = #tpu.dot_dimension_numbers<[1], [0], [0], [1], [0, 0, 1, 1], [], []>} : vector<8x256xbf16>, vector<256x384xbf16>, vector<8x384xf32> -> vector<8x384xf32>
    %7 = vector.extract_strided_slice %6 {offsets = [0, 0], sizes = [8, 128], strides = [1, 1]} : vector<8x384xf32> to vector<8x128xf32>
    %8 = vector.extract_strided_slice %6 {offsets = [0, 128], sizes = [8, 128], strides = [1, 1]} : vector<8x384xf32> to vector<8x128xf32>
    %9 = vector.extract_strided_slice %6 {offsets = [0, 256], sizes = [8, 128], strides = [1, 1]} : vector<8x384xf32> to vector<8x128xf32>
    %c0_5 = arith.constant 0 : index
    %c0_6 = arith.constant 0 : index
    %10 = vector.load %arg3[%c0_5, %c0_6] : memref<8x128xf32, #tpu.memory_space<vmem>>, vector<8x128xf32>
    %c0_7 = arith.constant 0 : index
    %c0_8 = arith.constant 0 : index
    %11 = vector.load %arg4[%c0_7, %c0_8] : memref<8x128xf32, #tpu.memory_space<vmem>>, vector<8x128xf32>
    %12 = arith.mulf %7, %10 : vector<8x128xf32>
    %c64_i32 = arith.constant 64 : i32
    %13 = tpu.dynamic_rotate %7 by %c64_i32 dim 1 : vector<8x128xf32>, i32 -> vector<8x128xf32>
    %14 = arith.mulf %13, %11 : vector<8x128xf32>
    %15 = arith.addf %12, %14 : vector<8x128xf32>
    %16 = arith.mulf %8, %10 : vector<8x128xf32>
    %c64_i32_9 = arith.constant 64 : i32
    %17 = tpu.dynamic_rotate %8 by %c64_i32_9 dim 1 : vector<8x128xf32>, i32 -> vector<8x128xf32>
    %18 = arith.mulf %17, %11 : vector<8x128xf32>
    %19 = arith.addf %16, %18 : vector<8x128xf32>
    %20 = arith.truncf %15 : vector<8x128xf32> to vector<8x128xbf16>
    %21 = arith.truncf %19 : vector<8x128xf32> to vector<8x128xbf16>
    %cst_10 = arith.constant dense<0.000000e+00> : vector<8x8xf32>
    %22 = tpu.matmul %20, %21, %cst_10 {dimension_numbers = #tpu.dot_dimension_numbers<[1], [1], [0], [0], [0, 0, 1, 0], [], []>} : vector<8x128xbf16>, vector<8x128xbf16>, vector<8x8xf32> -> vector<8x8xf32>
    %23 = tpu.iota {dimensions = array<i32: 0>} : vector<8x8xi32>
    %24 = tpu.iota {dimensions = array<i32: 1>} : vector<8x8xi32>
    %25 = arith.cmpi sle, %24, %23 : vector<8x8xi32>
    %cst_11 = arith.constant -1.000000e+30 : f32
    %26 = vector.broadcast %cst_11 : f32 to vector<8x8xf32>
    %27 = arith.select %25, %22, %26 : vector<8x8xi1>, vector<8x8xf32>
    %cst_12 = arith.constant dense<0xFF800000> : vector<8xf32>
    %28 = vector.multi_reduction <maximumf>, %27, %cst_12 [1] : vector<8x8xf32> to vector<8xf32>
    %29 = vector.shape_cast %28 : vector<8xf32> to vector<8x1xf32>
    %30 = vector.broadcast %29 : vector<8x1xf32> to vector<8x8xf32>
    %31 = arith.subf %27, %30 : vector<8x8xf32>
    %32 = math.exp %31 : vector<8x8xf32>
    %cst_13 = arith.constant dense<0.000000e+00> : vector<8xf32>
    %33 = vector.multi_reduction <add>, %32, %cst_13 [1] : vector<8x8xf32> to vector<8xf32>
    %34 = vector.shape_cast %33 : vector<8xf32> to vector<8x1xf32>
    %35 = arith.truncf %32 : vector<8x8xf32> to vector<8x8xbf16>
    %36 = arith.truncf %9 : vector<8x128xf32> to vector<8x128xbf16>
    %cst_14 = arith.constant dense<0.000000e+00> : vector<8x128xf32>
    %37 = tpu.matmul %35, %36, %cst_14 {dimension_numbers = #tpu.dot_dimension_numbers<[1], [0], [0], [1], [0, 0, 1, 1], [], []>} : vector<8x8xbf16>, vector<8x128xbf16>, vector<8x128xf32> -> vector<8x128xf32>
    %38 = tpu.reciprocal %34 {approx = true} : vector<8x1xf32> -> vector<8x1xf32>
    %39 = vector.broadcast %38 : vector<8x1xf32> to vector<8x128xf32>
    %40 = arith.mulf %37, %39 : vector<8x128xf32>
    %c0_15 = arith.constant 0 : index
    %c0_16 = arith.constant 0 : index
    %c0_17 = arith.constant 0 : index
    %41 = vector.load %arg8[%c0_15, %c0_16, %c0_17] : memref<1x8x256xf32, #tpu.memory_space<vmem>>, vector<1x8x256xf32>
    %42 = vector.shape_cast %41 : vector<1x8x256xf32> to vector<8x256xf32>
    %43 = arith.truncf %40 : vector<8x128xf32> to vector<8x128xbf16>
    %c0_18 = arith.constant 0 : index
    %c0_19 = arith.constant 0 : index
    %c0_20 = arith.constant 0 : index
    %44 = vector.load %arg7[%c0_18, %c0_19, %c0_20] : memref<1x128x256xbf16, #tpu.memory_space<vmem>>, vector<1x128x256xbf16>
    %45 = vector.shape_cast %44 : vector<1x128x256xbf16> to vector<128x256xbf16>
    %cst_21 = arith.constant dense<0.000000e+00> : vector<8x256xf32>
    %46 = tpu.matmul %43, %45, %cst_21 {dimension_numbers = #tpu.dot_dimension_numbers<[1], [0], [0], [1], [0, 0, 1, 1], [], []>} : vector<8x128xbf16>, vector<128x256xbf16>, vector<8x256xf32> -> vector<8x256xf32>
    %47 = arith.addf %42, %46 : vector<8x256xf32>
    %c0_22 = arith.constant 0 : index
    %c0_23 = arith.constant 0 : index
    %c0_24 = arith.constant 0 : index
    %48 = vector.load %arg8[%c0_22, %c0_23, %c0_24] : memref<1x8x256xf32, #tpu.memory_space<vmem>>, vector<1x8x256xf32>
    %49 = vector.shape_cast %48 : vector<1x8x256xf32> to vector<8x256xf32>
    %50 = vector.shape_cast %47 : vector<8x256xf32> to vector<1x8x256xf32>
    tpu.vector_store %arg8[%c0_22, %c0_23, %c0_24], %50 {strides = array<i32>} : memref<1x8x256xf32, #tpu.memory_space<vmem>>, vector<1x8x256xf32>,
    return
  }
  func.func @transform_0(%arg0: i32, %arg1: i32) -> (i32, i32, i32) {
    %c0_i32 = arith.constant 0 : i32
    %c0_i32_0 = arith.constant 0 : i32
    %c0_i32_1 = arith.constant 0 : i32
    return %arg0, %c0_i32, %c0_i32_0 : i32, i32, i32
  }
  func.func @transform_1(%arg0: i32, %arg1: i32) -> (i32, i32) {
    %c0_i32 = arith.constant 0 : i32
    %c0_i32_0 = arith.constant 0 : i32
    %c0_i32_1 = arith.constant 0 : i32
    return %c0_i32, %c0_i32_0 : i32, i32
  }
  func.func @transform_2(%arg0: i32, %arg1: i32) -> (i32, i32) {
    %c0_i32 = arith.constant 0 : i32
    %c0_i32_0 = arith.constant 0 : i32
    %c0_i32_1 = arith.constant 0 : i32
    return %c0_i32, %c0_i32_0 : i32, i32
  }
  func.func @transform_3(%arg0: i32, %arg1: i32) -> (i32, i32) {
    %c0_i32 = arith.constant 0 : i32
    %c0_i32_0 = arith.constant 0 : i32
    %c0_i32_1 = arith.constant 0 : i32
    return %c0_i32, %c0_i32_0 : i32, i32
  }
  func.func @transform_4(%arg0: i32, %arg1: i32) -> (i32, i32, i32) {
    %c0_i32 = arith.constant 0 : i32
    %c0_i32_0 = arith.constant 0 : i32
    %c0_i32_1 = arith.constant 0 : i32
    return %arg1, %c0_i32, %c0_i32_0 : i32, i32, i32
  }
  func.func @transform_5(%arg0: i32, %arg1: i32) -> (i32, i32, i32) {
    %c0_i32 = arith.constant 0 : i32
    %c0_i32_0 = arith.constant 0 : i32
    %c0_i32_1 = arith.constant 0 : i32
    return %arg1, %c0_i32, %c0_i32_0 : i32, i32, i32
  }
  func.func @transform_6(%arg0: i32, %arg1: i32) -> (i32, i32, i32) {
    %c0_i32 = arith.constant 0 : i32
    %c0_i32_0 = arith.constant 0 : i32
    %c0_i32_1 = arith.constant 0 : i32
    return %arg0, %c0_i32, %c0_i32_0 : i32, i32, i32
  }
}

</mosaic_0001>

<llo_original>
// kernel: tpu_custom_call.1
$region0: #{tpu_custom_call.1}
  #allocation0 [shape = 'u32[]', space=smem, size = 0x4, offset = 0x4, fixed_abs, tag = 'smem constant byte address 0x4 - core index']
  #allocation1 [shape = 'u32[144,128]{1,0:T(1,128)}', space=vmem, size = 0x12000, scoped, tag = 'internal scratch']
  #allocation2 [shape = 'bf16[8,256]{1,0:T(8,128)(2,1)}', space=vmem, size = 0x1000, scoped, tag = 'scratch operand']
  %s0 = inlined_call_operand.hbm [shape: f32[2,8,256], index: 0, kind: input, shape index: {}]
  %s1 = inlined_call_operand.hbm [shape: f32[8,128], index: 1, kind: input, shape index: {}]
  %s2 = inlined_call_operand.hbm [shape: f32[8,128], index: 2, kind: input, shape index: {}]
  %s3 = inlined_call_operand.vmem [shape: f32[1,256], index: 3, kind: input, shape index: {}]
  %s4 = inlined_call_operand.hbm [shape: bf16[2,256,384], index: 4, kind: input, shape index: {}]
  %s5 = inlined_call_operand.hbm [shape: bf16[2,128,256], index: 5, kind: input, shape index: {}]
  %s6 = inlined_call_operand.hbm [shape: f32[2,8,256], index: 6, kind: output, shape index: {}]
  %s7 = sld [smem:[#allocation0]]
  $region81: #{tpu_custom_call.1} parent=0
    _
  %s9 = ssub.s32 1, %s7
  %s10 = scalar_select 0, %s9, %s7
  $region1: #{tpu_custom_call.1} parent=0
    #allocation3 [shape = 'u8[8192]{0}', space=vmem, size = 0x2000, scoped, tag = 'input window, operand 0, single buffered']
    #allocation4 [shape = 's32[2]{0}', space=sflag, size = 0x8, scoped, tag = 'scoped memory for tpu_custom_call.1']
    #allocation5 [shape = 's32[2]{0}', space=sflag, size = 0x8, scoped, tag = 'scoped memory for tpu_custom_call.1']
    #allocation6 [shape = 'u8[4096]{0}', space=vmem, size = 0x1000, scoped, tag = 'input window, operand 1, single buffered']
    #allocation7 [shape = 's32[1]{0}', space=sflag, size = 0x4, scoped, tag = 'scoped memory for tpu_custom_call.1']
    #allocation8 [shape = 'u8[4096]{0}', space=vmem, size = 0x1000, scoped, tag = 'input window, operand 2, single buffered']
    #allocation9 [shape = 'u8[393216]{0}', space=vmem, size = 0x60000, scoped, tag = 'input window, operand 4']
    #allocation10 [shape = 's32[2]{0}', space=sflag, size = 0x8, scoped, tag = 'scoped memory for tpu_custom_call.1']
    #allocation11 [shape = 'u8[131072]{0}', space=vmem, size = 0x20000, scoped, tag = 'input window, operand 5']
    #allocation12 [shape = 'u8[16384]{0}', space=vmem, size = 0x4000, scoped, tag = 'output window, operand 0']
    %11 = vsyncpa [#allocation4], 0
    %12 = vsyncpa [#allocation7], 0
    %13 = vsyncpa [#allocation10], 0
    %s14 = scalar_lea.sflag [#allocation10], 1
    %15 = vsyncpa %s14, 0
    %16 = vsyncpa [#allocation5], 0
    %s17 = scalar_lea.sflag [#allocation5], 1
    %18 = vsyncpa %s17, 0
    loop: start=0, step=1, limit=6
    $region2: #{tpu_custom_call.1} parent=1 // loop_pre_header
      _
    $region3: #{tpu_custom_call.1} parent=1 // loop_header
      %s20 = sphi 0, %s24
      %p21 = scmp.ge.s32.totalorder %s20, 6
      %s27 = sphi 0, %s39
      %s28 = sphi 0, %s35
      %s29 = sphi 0, %s27
      %s30 = sphi 0, %s28
      %s31 = sphi 0, %s29
      %s32 = sphi 0, %s30
      %s42 = sphi 0, %s44
      %s45 = sphi 0, %s42
      %s46 = sphi 0, %s45
      %s62 = sphi 0, %s46
      %s66 = sphi 0, %s66
      %s68 = sphi 0, %s66
      %s69 = sphi 0, %s68
      %s83 = sphi 0, %s69
      %s87 = sphi 0, %s87
      %s89 = sphi 0, %s87
      %s90 = sphi 0, %s89
      %s104 = sphi 0, %s90
      %s108 = sphi 0, %s108
      %s110 = sphi 0, %s108
      %s111 = sphi 0, %s110
      %s125 = sphi 0, %s111
      %s131 = sphi 0, %s133
      %s134 = sphi 0, %s131
      %s135 = sphi 0, %s134
      %s151 = sphi 0, %s135
      %s157 = sphi 0, %s159
      %s160 = sphi 0, %s157
      %s161 = sphi 0, %s160
      %s177 = sphi 0, %s161
      %s183 = sphi 0, %s185
      %s186 = sphi 0, %s183
      %s187 = sphi 0, %s186
      %s203 = sphi 0, %s187
    $region4: #{tpu_custom_call.1} parent=1 // loop_header_branch
      %23 = sbr.rel (%p21) target = $region8
    $region5: #{tpu_custom_call.1} parent=1 // loop_body
      %s25 = ssub.s32 %s20, 1
      %s26 = ssub.s32 %s20, 2
      %s33 = sadd.s32 1, %s28
      %p34 = scmp.ge.s32.totalorder %s33, 2
      %s35 = scalar_select %p34, 0, %s33
      %s36 = sadd.s32 1, %s27
      %s37 = scalar_select %p34, %s36, %s27
      %p38 = scmp.ge.s32.totalorder %s37, 2
      %s39 = scalar_select %p38, 0, %s37
      %s40 = ssub.s32 %s27, %s39
      %p41 = scmp.eq.s32.totalorder %s40, 0
      %s43 = sadd.s32 %s42, 1
      %s44 = scalar_select %p41, %s42, %s43
      %p47 = pneg %p41
      %p48 = scmp.eq.s32.totalorder %s20, 3
      %p49 = por %p47, %p48
      %p50 = scmp.ne.s32.totalorder %s42, %s45
      %p51 = scmp.eq.s32.totalorder %s20, 0
      %p52 = por %p50, %p51
      %p53 = scmp.ne.s32.totalorder %s42, %s45
      %p54 = scmp.eq.s32.totalorder %s25, 3
      %p55 = por %p53, %p54
      %p56 = scmp.ne.s32.totalorder %s45, %s46
      %p57 = scmp.eq.s32.totalorder %s25, 0
      %p58 = por %p56, %p57
      %p59 = scmp.ne.s32.totalorder %s45, %s46
      %p60 = scmp.eq.s32.totalorder %s26, 3
      %p61 = por %p59, %p60
      %p63 = scmp.ne.s32.totalorder %s46, %s62
      %p64 = scmp.eq.s32.totalorder %s26, 0
      %p65 = por %p63, %p64
      %s67 = sadd.s32 %s66, 1
      %p70 = scmp.eq.s32.totalorder %s20, 3
      %p71 = scmp.ne.s32.totalorder %s66, %s68
      %p72 = scmp.eq.s32.totalorder %s20, 0
      %p73 = por %p71, %p72
      %p74 = scmp.ne.s32.totalorder %s66, %s68
      %p75 = scmp.eq.s32.totalorder %s25, 3
      %p76 = por %p74, %p75
      %p77 = scmp.ne.s32.totalorder %s68, %s69
      %p78 = scmp.eq.s32.totalorder %s25, 0
      %p79 = por %p77, %p78
      %p80 = scmp.ne.s32.totalorder %s68, %s69
      %p81 = scmp.eq.s32.totalorder %s26, 3
      %p82 = por %p80, %p81
      %p84 = scmp.ne.s32.totalorder %s69, %s83
      %p85 = scmp.eq.s32.totalorder %s26, 0
      %p86 = por %p84, %p85
      %s88 = sadd.s32 %s87, 1
      %p91 = scmp.eq.s32.totalorder %s20, 3
      %p92 = scmp.ne.s32.totalorder %s87, %s89
      %p93 = scmp.eq.s32.totalorder %s20, 0
      %p94 = por %p92, %p93
      %p95 = scmp.ne.s32.totalorder %s87, %s89
      %p96 = scmp.eq.s32.totalorder %s25, 3
      %p97 = por %p95, %p96
      %p98 = scmp.ne.s32.totalorder %s89, %s90
      %p99 = scmp.eq.s32.totalorder %s25, 0
      %p100 = por %p98, %p99
      %p101 = scmp.ne.s32.totalorder %s89, %s90
      %p102 = scmp.eq.s32.totalorder %s26, 3
      %p103 = por %p101, %p102
      %p105 = scmp.ne.s32.totalorder %s90, %s104
      %p106 = scmp.eq.s32.totalorder %s26, 0
      %p107 = por %p105, %p106
      %s109 = sadd.s32 %s108, 1
      %p112 = scmp.eq.s32.totalorder %s20, 3
      %p113 = scmp.ne.s32.totalorder %s108, %s110
      %p114 = scmp.eq.s32.totalorder %s20, 0
      %p115 = por %p113, %p114
      %p116 = scmp.ne.s32.totalorder %s108, %s110
      %p117 = scmp.eq.s32.totalorder %s25, 3
      %p118 = por %p116, %p117
      %p119 = scmp.ne.s32.totalorder %s110, %s111
      %p120 = scmp.eq.s32.totalorder %s25, 0
      %p121 = por %p119, %p120
      %p122 = scmp.ne.s32.totalorder %s110, %s111
      %p123 = scmp.eq.s32.totalorder %s26, 3
      %p124 = por %p122, %p123
      %p126 = scmp.ne.s32.totalorder %s111, %s125
      %p127 = scmp.eq.s32.totalorder %s26, 0
      %p128 = por %p126, %p127
      %s129 = ssub.s32 %s28, %s35
      %p130 = scmp.eq.s32.totalorder %s129, 0
      %s132 = sadd.s32 %s131, 1
      %s133 = scalar_select %p130, %s131, %s132
      %p136 = pneg %p130
      %p137 = scmp.eq.s32.totalorder %s20, 3
      %p138 = por %p136, %p137
      %p139 = scmp.ne.s32.totalorder %s131, %s134
      %p140 = scmp.eq.s32.totalorder %s20, 0
      %p141 = por %p139, %p140
      %p142 = scmp.ne.s32.totalorder %s131, %s134
      %p143 = scmp.eq.s32.totalorder %s25, 3
      %p144 = por %p142, %p143
      %p145 = scmp.ne.s32.totalorder %s134, %s135
      %p146 = scmp.eq.s32.totalorder %s25, 0
      %p147 = por %p145, %p146
      %p148 = scmp.ne.s32.totalorder %s134, %s135
      %p149 = scmp.eq.s32.totalorder %s26, 3
      %p150 = por %p148, %p149
      %p152 = scmp.ne.s32.totalorder %s135, %s151
      %p153 = scmp.eq.s32.totalorder %s26, 0
      %p154 = por %p152, %p153
      %s155 = ssub.s32 %s28, %s35
      %p156 = scmp.eq.s32.totalorder %s155, 0
      %s158 = sadd.s32 %s157, 1
      %s159 = scalar_select %p156, %s157, %s158
      %p162 = pneg %p156
      %p163 = scmp.eq.s32.totalorder %s20, 3
      %p164 = por %p162, %p163
      %p165 = scmp.ne.s32.totalorder %s157, %s160
      %p166 = scmp.eq.s32.totalorder %s20, 0
      %p167 = por %p165, %p166
      %p168 = scmp.ne.s32.totalorder %s157, %s160
      %p169 = scmp.eq.s32.totalorder %s25, 3
      %p170 = por %p168, %p169
      %p171 = scmp.ne.s32.totalorder %s160, %s161
      %p172 = scmp.eq.s32.totalorder %s25, 0
      %p173 = por %p171, %p172
      %p174 = scmp.ne.s32.totalorder %s160, %s161
      %p175 = scmp.eq.s32.totalorder %s26, 3
      %p176 = por %p174, %p175
      %p178 = scmp.ne.s32.totalorder %s161, %s177
      %p179 = scmp.eq.s32.totalorder %s26, 0
      %p180 = por %p178, %p179
      %s181 = ssub.s32 %s27, %s39
      %p182 = scmp.eq.s32.totalorder %s181, 0
      %s184 = sadd.s32 %s183, 1
      %s185 = scalar_select %p182, %s183, %s184
      %p188 = pneg %p182
      %p189 = scmp.eq.s32.totalorder %s20, 3
      %p190 = por %p188, %p189
      %p191 = scmp.ne.s32.totalorder %s183, %s186
      %p192 = scmp.eq.s32.totalorder %s20, 0
      %p193 = por %p191, %p192
      %p194 = scmp.ne.s32.totalorder %s183, %s186
      %p195 = scmp.eq.s32.totalorder %s25, 3
      %p196 = por %p194, %p195
      %p197 = scmp.ne.s32.totalorder %s186, %s187
      %p198 = scmp.eq.s32.totalorder %s25, 0
      %p199 = por %p197, %p198
      %p200 = scmp.ne.s32.totalorder %s186, %s187
      %p201 = scmp.eq.s32.totalorder %s26, 3
      %p202 = por %p200, %p201
      %p204 = scmp.ne.s32.totalorder %s187, %s203
      %p205 = scmp.eq.s32.totalorder %s26, 0
      %p206 = por %p204, %p205
      %p207 = scmp.le.s32.totalorder 1, %s20
      %p208 = scmp.lt.s32.totalorder %s20, 5
      %p209 = pnand %p207, %p208
      %p210 = pneg %p209
      // Predicated region
      $region9: #{tpu_custom_call.1} parent=5 // pred_check
        _
      $region10: #{tpu_custom_call.1} parent=5 // pred_check_branch
        %212 = sbr.rel (%p209) target = $region12
      $region11: #{tpu_custom_call.1} parent=5 // pred_region
        %s213 = ssub.s32 %s20, 1
        // Predicated region
        $region13: #{tpu_custom_call.1} parent=11 // pred_check
          %p214 = pneg %p58
        $region14: #{tpu_custom_call.1} parent=11 // pred_check_branch
          %216 = sbr.rel (%p214) target = $region16
        $region15: #{tpu_custom_call.1} parent=11 // pred_region
          %s218 = ssub.s32 256, 256
          %219 = vsyncadd [#allocation4], %s218
          %s220 = smul.addr %s29, 2
          %s221 = smul.addr %s220, 128
          %s222 = scalar_lea.hbm %s0, %s221
          %s224 = sshll.u32 [#allocation3], 4
          %s225 = int_to_ptr.vmem [resolvable:$true] %s224
          %227 = dma.hbm_to_vmem [thread:$0]  %s222, 256, %s225, [#allocation4]
        $region16: #{tpu_custom_call.1} parent=11 // pred_fallthru
          _
        // Predicated region
        $region17: #{tpu_custom_call.1} parent=11 // pred_check
          %p228 = pneg %p79
        $region18: #{tpu_custom_call.1} parent=11 // pred_check_branch
          %230 = sbr.rel (%p228) target = $region20
        $region19: #{tpu_custom_call.1} parent=11 // pred_region
          %s232 = ssub.s32 128, 128
          %233 = vsyncadd [#allocation7], %s232
          %s235 = sshll.u32 [#allocation6], 4
          %s236 = int_to_ptr.vmem [resolvable:$true] %s235
          %238 = dma.hbm_to_vmem [thread:$0]  %s1, 128, %s236, [#allocation7]
        $region20: #{tpu_custom_call.1} parent=11 // pred_fallthru
          _
        // Predicated region
        $region21: #{tpu_custom_call.1} parent=11 // pred_check
          %p239 = pneg %p100
        $region22: #{tpu_custom_call.1} parent=11 // pred_check_branch
          %241 = sbr.rel (%p239) target = $region24
        $region23: #{tpu_custom_call.1} parent=11 // pred_region
          %s243 = ssub.s32 128, 128
          %244 = vsyncadd [#allocation7], %s243
          %s246 = sshll.u32 [#allocation8], 4
          %s247 = int_to_ptr.vmem [resolvable:$true] %s246
          %249 = dma.hbm_to_vmem [thread:$0]  %s2, 128, %s247, [#allocation7]
        $region24: #{tpu_custom_call.1} parent=11 // pred_fallthru
          _
        // Predicated region
        $region25: #{tpu_custom_call.1} parent=11 // pred_check
          %p250 = pneg %p121
        $region26: #{tpu_custom_call.1} parent=11 // pred_check_branch
          %252 = sbr.rel (%p250) target = $region28
        $region27: #{tpu_custom_call.1} parent=11 // pred_region
          _
        $region28: #{tpu_custom_call.1} parent=11 // pred_fallthru
          _
      $region12: #{tpu_custom_call.1} parent=5 // pred_fallthru
        _
      %p253 = scmp.lt.s32.totalorder %s20, 4
      // Predicated region
      $region29: #{tpu_custom_call.1} parent=5 // pred_check
        %p254 = pneg %p253
      $region30: #{tpu_custom_call.1} parent=5 // pred_check_branch
        %256 = sbr.rel (%p254) target = $region32
      $region31: #{tpu_custom_call.1} parent=5 // pred_region
        // Predicated region
        $region33: #{tpu_custom_call.1} parent=31 // pred_check
          %p257 = pneg %p141
        $region34: #{tpu_custom_call.1} parent=31 // pred_check_branch
          %259 = sbr.rel (%p257) target = $region36
        $region35: #{tpu_custom_call.1} parent=31 // pred_region
          %s260 = sand.u32 %s20, 1
          %s261 = scalar_lea.sflag [#allocation10], %s260
          %s262 = sand.u32 %s131, 1
          %s263 = smul.addr %s262, 384
          %s264 = scalar_lea.vmem [#allocation9], %s263
          %s266 = ssub.s32 6144, 6144
          %267 = vsyncadd %s261, %s266
          %s268 = smul.addr %s28, 96
          %s269 = smul.addr %s268, 64
          %s270 = scalar_lea.hbm %s4, %s269
          %s271 = sshll.u32 %s264, 4
          %s272 = int_to_ptr.vmem [resolvable:$true] %s271
          %277 = dma.hbm_to_vmem [thread:$0]  %s270, 6144, %s272, %s261, 192, 192, 12
        $region36: #{tpu_custom_call.1} parent=31 // pred_fallthru
          _
        // Predicated region
        $region37: #{tpu_custom_call.1} parent=31 // pred_check
          %p278 = pneg %p167
        $region38: #{tpu_custom_call.1} parent=31 // pred_check_branch
          %280 = sbr.rel (%p278) target = $region40
        $region39: #{tpu_custom_call.1} parent=31 // pred_region
          %s281 = sand.u32 %s20, 1
          %s282 = scalar_lea.sflag [#allocation10], %s281
          %s283 = sand.u32 %s157, 1
          %s284 = smul.addr %s283, 128
          %s285 = scalar_lea.vmem [#allocation11], %s284
          %s287 = ssub.s32 2048, 2048
          %288 = vsyncadd %s282, %s287
          %s289 = smul.addr %s28, 32
          %s290 = smul.addr %s289, 64
          %s291 = scalar_lea.hbm %s5, %s290
          %s292 = sshll.u32 %s285, 4
          %s293 = int_to_ptr.vmem [resolvable:$true] %s292
          %298 = dma.hbm_to_vmem [thread:$0]  %s291, 2048, %s293, %s282, 128, 128, 8
        $region40: #{tpu_custom_call.1} parent=31 // pred_fallthru
          _
      $region32: #{tpu_custom_call.1} parent=5 // pred_fallthru
        _
      %p299 = scmp.le.s32.totalorder 1, %s20
      %p300 = scmp.lt.s32.totalorder %s20, 5
      %p301 = pnand %p299, %p300
      %p302 = pneg %p301
      // Predicated region
      $region41: #{tpu_custom_call.1} parent=5 // pred_check
        _
      $region42: #{tpu_custom_call.1} parent=5 // pred_check_branch
        %304 = sbr.rel (%p301) target = $region44
      $region43: #{tpu_custom_call.1} parent=5 // pred_region
        %s305 = ssub.s32 %s20, 1
        // Predicated region
        $region45: #{tpu_custom_call.1} parent=43 // pred_check
          %p306 = pneg %p58
        $region46: #{tpu_custom_call.1} parent=43 // pred_check_branch
          %308 = sbr.rel (%p306) target = $region48
        $region47: #{tpu_custom_call.1} parent=43 // pred_region
          %309 = dma.done [#allocation4], 256
        $region48: #{tpu_custom_call.1} parent=43 // pred_fallthru
          _
        // Predicated region
        $region49: #{tpu_custom_call.1} parent=43 // pred_check
          %p310 = pneg %p79
        $region50: #{tpu_custom_call.1} parent=43 // pred_check_branch
          %312 = sbr.rel (%p310) target = $region52
        $region51: #{tpu_custom_call.1} parent=43 // pred_region
          %313 = dma.done [#allocation7], 128
        $region52: #{tpu_custom_call.1} parent=43 // pred_fallthru
          _
        // Predicated region
        $region53: #{tpu_custom_call.1} parent=43 // pred_check
          %p314 = pneg %p100
        $region54: #{tpu_custom_call.1} parent=43 // pred_check_branch
          %316 = sbr.rel (%p314) target = $region56
        $region55: #{tpu_custom_call.1} parent=43 // pred_region
          %317 = dma.done [#allocation7], 128
        $region56: #{tpu_custom_call.1} parent=43 // pred_fallthru
          _
        %s318 = sand.u32 %s25, 1
        %s319 = scalar_lea.sflag [#allocation10], %s318
        %s320 = sand.u32 %s134, 1
        %s321 = smul.addr %s320, 384
        %s322 = scalar_lea.vmem [#allocation9], %s321
        // Predicated region
        $region57: #{tpu_custom_call.1} parent=43 // pred_check
          %p323 = pneg %p147
        $region58: #{tpu_custom_call.1} parent=43 // pred_check_branch
          %325 = sbr.rel (%p323) target = $region60
        $region59: #{tpu_custom_call.1} parent=43 // pred_region
          %326 = dma.done %s319, 6144
        $region60: #{tpu_custom_call.1} parent=43 // pred_fallthru
          _
        %s327 = sand.u32 %s25, 1
        %s328 = scalar_lea.sflag [#allocation10], %s327
        %s329 = sand.u32 %s160, 1
        %s330 = smul.addr %s329, 128
        %s331 = scalar_lea.vmem [#allocation11], %s330
        // Predicated region
        $region61: #{tpu_custom_call.1} parent=43 // pred_check
          %p332 = pneg %p173
        $region62: #{tpu_custom_call.1} parent=43 // pred_check_branch
          %334 = sbr.rel (%p332) target = $region64
        $region63: #{tpu_custom_call.1} parent=43 // pred_region
          %335 = dma.done %s328, 2048
        $region64: #{tpu_custom_call.1} parent=43 // pred_fallthru
          _
        %p336 = pneg %p58
        %p337 = pneg %p55
        %p338 = pneg %p79
        %p339 = pneg %p76
        %p340 = pneg %p100
        %p341 = pneg %p97
        %p342 = pneg %p121
        %p343 = pneg %p118
        %s344 = sand.u32 %s25, 1
        %s345 = scalar_lea.sflag [#allocation10], %s344
        %s346 = sand.u32 %s134, 1
        %s347 = smul.addr %s346, 384
        %s348 = scalar_lea.vmem [#allocation9], %s347
        %p349 = pneg %p147
        %p350 = pneg %p144
        %s351 = sand.u32 %s25, 1
        %s352 = scalar_lea.sflag [#allocation10], %s351
        %s353 = sand.u32 %s160, 1
        %s354 = smul.addr %s353, 128
        %s355 = scalar_lea.vmem [#allocation11], %s354
        %p356 = pneg %p173
        %p357 = pneg %p170
        %p358 = pneg %p199
        %p359 = pneg %p196
        %s360 = sand.u32 %s186, 1
        %s361 = scalar_lea.sflag [#allocation5], %s360
        %s362 = sand.u32 %s186, 1
        %s363 = smul.addr %s362, 16
        %s364 = scalar_lea.vmem [#allocation12], %s363
        %p366 = scmp.eq.s32.totalorder %s30, 0
        // Predicated region
        $region65: #{tpu_custom_call.1} parent=43 // pred_check
          %p367 = pneg %p366
        $region66: #{tpu_custom_call.1} parent=43 // pred_check_branch
          %369 = sbr.rel (%p367) target = $region68
        $region67: #{tpu_custom_call.1} parent=43 // pred_region
          %v370 = vld [vmem:[#allocation3] sm:$0xff]
          %v371 = vld [vmem:[#allocation3 + $0x8] sm:$0xff]
          %v372 = vld [vmem:[%s3] sm:$0x3]
          %v373 = vmul.f32 %v370, %v370
          %v374 = vmul.f32 %v371, %v371
          %v375 = vadd.f32 %v373, %v374
          %376 = vadd.xlane.f32.xlu0 %v375
          %v377 = vpop.xlane.xlu0 %376
          %v378 = vrcp.pop 256.0
          %v379 = vmul.f32 %v377, %v378
          %v380 = vadd.f32 %v379, 1e-06
          %v381 = vrsqrt.pop %v380
          %v382 = vmul.f32 %v370, %v381
          %v383 = vmul.f32 %v371, %v381
          %v385 = vlaneseq
          %v386 = vshrl.u32 %v385, 7
          %v387 = vsub.s32 0, %v386
          %v388 = vrot.slane %v372, %v387
          %v389 = vlaneseq
          %v390 = vshrl.u32 %v389, 7
          %v391 = vsub.s32 1, %v390
          %v392 = vrot.slane %v372, %v391
          %v395 = vmul.f32 %v382, %v388
          %v396 = vmul.f32 %v383, %v392
          %v397 = vpack.c.bf16 %v395, %v395
          %v398 = vpack.c.bf16 %v396, %v396
          %v401 = vunpack.c.l.b16 %v397
          %v402 = vunpack.c.l.b16 %v398
          %v403 = vpack.c.b16 %v402, %v401
          %405 = vst [vmem:[#allocation2] sm:$0xff] %v403
          %v406 = vld [vmem:[#allocation3] sm:$0xff]
          %v407 = vld [vmem:[#allocation3 + $0x8] sm:$0xff]
          %408 = vst [vmem:[%s364] sm:$0xff] %v406
          %409 = vst [vmem:[%s364 + $0x8] sm:$0xff] %v407
        $region68: #{tpu_custom_call.1} parent=43 // pred_fallthru
          _
        %v410 = vld [vmem:[#allocation2] sm:$0xff]
        %v411 = vld [vmem:[%s322] sm:$0xff]
        %v412 = vld [vmem:[%s322 + $0x8] sm:$0xf]
        %v413 = vld [vmem:[%s322 + $0xc] sm:$0xff]
        %v414 = vld [vmem:[%s322 + $0x14] sm:$0xf]
        %v415 = vld [vmem:[%s322 + $0x18] sm:$0xff]
        %v416 = vld [vmem:[%s322 + $0x20] sm:$0xf]
        %v417 = vld [vmem:[%s322 + $0x24] sm:$0xff]
        %v418 = vld [vmem:[%s322 + $0x2c] sm:$0xf]
        %v419 = vld [vmem:[%s322 + $0x30] sm:$0xff]
        %v420 = vld [vmem:[%s322 + $0x38] sm:$0xf]
        %v421 = vld [vmem:[%s322 + $0x3c] sm:$0xff]
        %v422 = vld [vmem:[%s322 + $0x44] sm:$0xf]
        %v423 = vld [vmem:[%s322 + $0x48] sm:$0xff]
        %v424 = vld [vmem:[%s322 + $0x50] sm:$0xf]
        %v425 = vld [vmem:[%s322 + $0x54] sm:$0xff]
        %v426 = vld [vmem:[%s322 + $0x5c] sm:$0xf]
        %v427 = vld [vmem:[%s322 + $0x60] sm:$0xff]
        %v428 = vld [vmem:[%s322 + $0x68] sm:$0xf]
        %v429 = vld [vmem:[%s322 + $0x6c] sm:$0xff]
        %v430 = vld [vmem:[%s322 + $0x74] sm:$0xf]
        %v431 = vld [vmem:[%s322 + $0x78] sm:$0xff]
        %v432 = vld [vmem:[%s322 + $0x80] sm:$0xf]
        %v433 = vld [vmem:[%s322 + $0x84] sm:$0xff]
        %v434 = vld [vmem:[%s322 + $0x8c] sm:$0xf]
        %v435 = vld [vmem:[%s322 + $0x90] sm:$0xff]
        %v436 = vld [vmem:[%s322 + $0x98] sm:$0xf]
        %v437 = vld [vmem:[%s322 + $0x9c] sm:$0xff]
        %v438 = vld [vmem:[%s322 + $0xa4] sm:$0xf]
        %v439 = vld [vmem:[%s322 + $0xa8] sm:$0xff]
        %v440 = vld [vmem:[%s322 + $0xb0] sm:$0xf]
        %v441 = vld [vmem:[%s322 + $0xb4] sm:$0xff]
        %v442 = vld [vmem:[%s322 + $0xbc] sm:$0xf]
        %v443 = vld [vmem:[%s322 + $0xc0] sm:$0xff]
        %v444 = vld [vmem:[%s322 + $0xc8] sm:$0xf]
        %v445 = vld [vmem:[%s322 + $0xcc] sm:$0xff]
        %v446 = vld [vmem:[%s322 + $0xd4] sm:$0xf]
        %v447 = vld [vmem:[%s322 + $0xd8] sm:$0xff]
        %v448 = vld [vmem:[%s322 + $0xe0] sm:$0xf]
        %v449 = vld [vmem:[%s322 + $0xe4] sm:$0xff]
        %v450 = vld [vmem:[%s322 + $0xec] sm:$0xf]
        %v451 = vld [vmem:[%s322 + $0xf0] sm:$0xff]
        %v452 = vld [vmem:[%s322 + $0xf8] sm:$0xf]
        %v453 = vld [vmem:[%s322 + $0xfc] sm:$0xff]
        %v454 = vld [vmem:[%s322 + $0x104] sm:$0xf]
        %v455 = vld [vmem:[%s322 + $0x108] sm:$0xff]
        %v456 = vld [vmem:[%s322 + $0x110] sm:$0xf]
        %v457 = vld [vmem:[%s322 + $0x114] sm:$0xff]
        %v458 = vld [vmem:[%s322 + $0x11c] sm:$0xf]
        %v459 = vld [vmem:[%s322 + $0x120] sm:$0xff]
        %v460 = vld [vmem:[%s322 + $0x128] sm:$0xf]
        %v461 = vld [vmem:[%s322 + $0x12c] sm:$0xff]
        %v462 = vld [vmem:[%s322 + $0x134] sm:$0xf]
        %v463 = vld [vmem:[%s322 + $0x138] sm:$0xff]
        %v464 = vld [vmem:[%s322 + $0x140] sm:$0xf]
        %v465 = vld [vmem:[%s322 + $0x144] sm:$0xff]
        %v466 = vld [vmem:[%s322 + $0x14c] sm:$0xf]
        %v467 = vld [vmem:[%s322 + $0x150] sm:$0xff]
        %v468 = vld [vmem:[%s322 + $0x158] sm:$0xf]
        %v469 = vld [vmem:[%s322 + $0x15c] sm:$0xff]
        %v470 = vld [vmem:[%s322 + $0x164] sm:$0xf]
        %v471 = vld [vmem:[%s322 + $0x168] sm:$0xff]
        %v472 = vld [vmem:[%s322 + $0x170] sm:$0xf]
        %v473 = vld [vmem:[%s322 + $0x174] sm:$0xff]
        %v474 = vld [vmem:[%s322 + $0x17c] sm:$0xf]
        %v476 = vunpack.c.l.b16 %v410
        %v477 = vunpack.c.h.b16 %v410
        %v478 = vpack.c.b16 %v476, %v476
        %v479 = vpack.c.b16 %v477, %v477
        %v546 = vunpack.c.l.b16 %v411
        %v547 = vunpack.c.h.b16 %v411
        %v548 = vunpack.c.l.b16 %v412
        %v549 = vunpack.c.l.b16 %v413
        %v550 = vunpack.c.h.b16 %v413
        %v551 = vunpack.c.l.b16 %v414
        %v552 = vunpack.c.l.b16 %v415
        %v553 = vunpack.c.h.b16 %v415
        %v554 = vunpack.c.l.b16 %v416
        %v555 = vunpack.c.l.b16 %v417
        %v556 = vunpack.c.h.b16 %v417
        %v557 = vunpack.c.l.b16 %v418
        %v558 = vunpack.c.l.b16 %v419
        %v559 = vunpack.c.h.b16 %v419
        %v560 = vunpack.c.l.b16 %v420
        %v561 = vunpack.c.l.b16 %v421
        %v562 = vunpack.c.h.b16 %v421
        %v563 = vunpack.c.l.b16 %v422
        %v564 = vunpack.c.l.b16 %v423
        %v565 = vunpack.c.h.b16 %v423
        %v566 = vunpack.c.l.b16 %v424
        %v567 = vunpack.c.l.b16 %v425
        %v568 = vunpack.c.h.b16 %v425
        %v569 = vunpack.c.l.b16 %v426
        %v570 = vunpack.c.l.b16 %v427
        %v571 = vunpack.c.h.b16 %v427
        %v572 = vunpack.c.l.b16 %v428
        %v573 = vunpack.c.l.b16 %v429
        %v574 = vunpack.c.h.b16 %v429
        %v575 = vunpack.c.l.b16 %v430
        %v576 = vunpack.c.l.b16 %v431
        %v577 = vunpack.c.h.b16 %v431
        %v578 = vunpack.c.l.b16 %v432
        %v579 = vunpack.c.l.b16 %v433
        %v580 = vunpack.c.h.b16 %v433
        %v581 = vunpack.c.l.b16 %v434
        %v582 = vunpack.c.l.b16 %v435
        %v583 = vunpack.c.h.b16 %v435
        %v584 = vunpack.c.l.b16 %v436
        %v585 = vunpack.c.l.b16 %v437
        %v586 = vunpack.c.h.b16 %v437
        %v587 = vunpack.c.l.b16 %v438
        %v588 = vunpack.c.l.b16 %v439
        %v589 = vunpack.c.h.b16 %v439
        %v590 = vunpack.c.l.b16 %v440
        %v591 = vunpack.c.l.b16 %v441
        %v592 = vunpack.c.h.b16 %v441
        %v593 = vunpack.c.l.b16 %v442
        %v594 = vunpack.c.l.b16 %v443
        %v595 = vunpack.c.h.b16 %v443
        %v596 = vunpack.c.l.b16 %v444
        %v597 = vunpack.c.l.b16 %v445
        %v598 = vunpack.c.h.b16 %v445
        %v599 = vunpack.c.l.b16 %v446
        %v600 = vunpack.c.l.b16 %v447
        %v601 = vunpack.c.h.b16 %v447
        %v602 = vunpack.c.l.b16 %v448
        %v603 = vunpack.c.l.b16 %v449
        %v604 = vunpack.c.h.b16 %v449
        %v605 = vunpack.c.l.b16 %v450
        %v606 = vunpack.c.l.b16 %v451
        %v607 = vunpack.c.h.b16 %v451
        %v608 = vunpack.c.l.b16 %v452
        %v609 = vunpack.c.l.b16 %v453
        %v610 = vunpack.c.h.b16 %v453
        %v611 = vunpack.c.l.b16 %v454
        %v612 = vunpack.c.l.b16 %v455
        %v613 = vunpack.c.h.b16 %v455
        %v614 = vunpack.c.l.b16 %v456
        %v615 = vunpack.c.l.b16 %v457
        %v616 = vunpack.c.h.b16 %v457
        %v617 = vunpack.c.l.b16 %v458
        %v618 = vunpack.c.l.b16 %v459
        %v619 = vunpack.c.h.b16 %v459
        %v620 = vunpack.c.l.b16 %v460
        %v621 = vunpack.c.l.b16 %v461
        %v622 = vunpack.c.h.b16 %v461
        %v623 = vunpack.c.l.b16 %v462
        %v624 = vunpack.c.l.b16 %v463
        %v625 = vunpack.c.h.b16 %v463
        %v626 = vunpack.c.l.b16 %v464
        %v627 = vunpack.c.l.b16 %v465
        %v628 = vunpack.c.h.b16 %v465
        %v629 = vunpack.c.l.b16 %v466
        %v630 = vunpack.c.l.b16 %v467
        %v631 = vunpack.c.h.b16 %v467
        %v632 = vunpack.c.l.b16 %v468
        %v633 = vunpack.c.l.b16 %v469
        %v634 = vunpack.c.h.b16 %v469
        %v635 = vunpack.c.l.b16 %v470
        %v636 = vunpack.c.l.b16 %v471
        %v637 = vunpack.c.h.b16 %v471
        %v638 = vunpack.c.l.b16 %v472
        %v639 = vunpack.c.l.b16 %v473
        %v640 = vunpack.c.h.b16 %v473
        %v641 = vunpack.c.l.b16 %v474
        %v642 = vpack.c.b16 %v549, %v546
        %v643 = vpack.c.b16 %v550, %v547
        %v644 = vpack.c.b16 %v551, %v548
        %v645 = vpack.c.b16 %v555, %v552
        %v646 = vpack.c.b16 %v556, %v553
        %v647 = vpack.c.b16 %v557, %v554
        %v648 = vpack.c.b16 %v561, %v558
        %v649 = vpack.c.b16 %v562, %v559
        %v650 = vpack.c.b16 %v563, %v560
        %v651 = vpack.c.b16 %v567, %v564
        %v652 = vpack.c.b16 %v568, %v565
        %v653 = vpack.c.b16 %v569, %v566
        %v654 = vpack.c.b16 %v573, %v570
        %v655 = vpack.c.b16 %v574, %v571
        %v656 = vpack.c.b16 %v575, %v572
        %v657 = vpack.c.b16 %v579, %v576
        %v658 = vpack.c.b16 %v580, %v577
        %v659 = vpack.c.b16 %v581, %v578
        %v660 = vpack.c.b16 %v585, %v582
        %v661 = vpack.c.b16 %v586, %v583
        %v662 = vpack.c.b16 %v587, %v584
        %v663 = vpack.c.b16 %v591, %v588
        %v664 = vpack.c.b16 %v592, %v589
        %v665 = vpack.c.b16 %v593, %v590
        %v666 = vpack.c.b16 %v597, %v594
        %v667 = vpack.c.b16 %v598, %v595
        %v668 = vpack.c.b16 %v599, %v596
        %v669 = vpack.c.b16 %v603, %v600
        %v670 = vpack.c.b16 %v604, %v601
        %v671 = vpack.c.b16 %v605, %v602
        %v672 = vpack.c.b16 %v609, %v606
        %v673 = vpack.c.b16 %v610, %v607
        %v674 = vpack.c.b16 %v611, %v608
        %v675 = vpack.c.b16 %v615, %v612
        %v676 = vpack.c.b16 %v616, %v613
        %v677 = vpack.c.b16 %v617, %v614
        %v678 = vpack.c.b16 %v621, %v618
        %v679 = vpack.c.b16 %v622, %v619
        %v680 = vpack.c.b16 %v623, %v620
        %v681 = vpack.c.b16 %v627, %v624
        %v682 = vpack.c.b16 %v628, %v625
        %v683 = vpack.c.b16 %v629, %v626
        %v684 = vpack.c.b16 %v633, %v630
        %v685 = vpack.c.b16 %v634, %v631
        %v686 = vpack.c.b16 %v635, %v632
        %v687 = vpack.c.b16 %v639, %v636
        %v688 = vpack.c.b16 %v640, %v637
        %v689 = vpack.c.b16 %v641, %v638
        %738 = vmatprep.subr.bf16.mxu0 %v664
        %739 = vmatpush1.bf16.msra.mxu0 %v663
        %740 = vmatprep.subr.bf16.mxu0 %v661
        %741 = vmatpush1.bf16.msra.mxu0 %v660
        %742 = vmatprep.subr.bf16.mxu0 %v658
        %743 = vmatpush1.bf16.msra.mxu0 %v657
        %744 = vmatprep.subr.bf16.mxu0 %v655
        %745 = vmatpush1.bf16.msra.mxu0 %v654
        %746 = vmatprep.subr.bf16.mxu0 %v652
        %747 = vmatpush1.bf16.msra.mxu0 %v651
        %748 = vmatprep.subr.bf16.mxu0 %v649
        %749 = vmatpush1.bf16.msra.mxu0 %v648
        %750 = vmatprep.subr.bf16.mxu0 %v646
        %751 = vmatpush1.bf16.msra.mxu0 %v645
        %752 = vmatprep.subr.bf16.mxu0 %v643
        %753 = vmatpush1.bf16.msra.mxu0 %v642
        %754 = vmatprep.subr.bf16.mxu0 %v688
        %755 = vmatpush2.bf16.msra.mxu0 %v687
        %756 = vmatprep.subr.bf16.mxu0 %v685
        %757 = vmatpush2.bf16.msra.mxu0 %v684
        %758 = vmatprep.subr.bf16.mxu0 %v682
        %759 = vmatpush2.bf16.msra.mxu0 %v681
        %760 = vmatprep.subr.bf16.mxu0 %v679
        %761 = vmatpush2.bf16.msra.mxu0 %v678
        %762 = vmatprep.subr.bf16.mxu0 %v676
        %763 = vmatpush2.bf16.msra.mxu0 %v675
        %764 = vmatprep.subr.bf16.mxu0 %v673
        %765 = vmatpush2.bf16.msra.mxu0 %v672
        %766 = vmatprep.subr.bf16.mxu0 %v670
        %767 = vmatpush2.bf16.msra.mxu0 %v669
        %768 = vmatprep.subr.bf16.mxu0 %v667
        %769 = vmatpush2.bf16.msra.mxu0 %v666
        %770 = vmatprep.mubr.bf16.mxu0 %v479
        %771 = vmatmul.mubr.bf16.gmra.mxu0 %v478
        %v772 = vpop.f32.mrf.mxu0
        %v773 = vadd.f32 0.0, %v772
        %v774 = vpop.f32.mrf.mxu0
        %v775 = vadd.f32 0.0, %v774
        %v776 = vpop.f32.mrf.mxu0
        %v777 = vpop.f32.mrf.mxu0
        %778 = vdwg.mxu0
        %779 = vmatprep.subr.bf16.mxu0 0
        %780 = vmatpush1.bf16.msra.mxu0 %v665
        %781 = vmatprep.subr.bf16.mxu0 0
        %782 = vmatpush1.bf16.msra.mxu0 %v662
        %783 = vmatprep.subr.bf16.mxu0 0
        %784 = vmatpush1.bf16.msra.mxu0 %v659
        %785 = vmatprep.subr.bf16.mxu0 0
        %786 = vmatpush1.bf16.msra.mxu0 %v656
        %787 = vmatprep.subr.bf16.mxu0 0
        %788 = vmatpush1.bf16.msra.mxu0 %v653
        %789 = vmatprep.subr.bf16.mxu0 0
        %790 = vmatpush1.bf16.msra.mxu0 %v650
        %791 = vmatprep.subr.bf16.mxu0 0
        %792 = vmatpush1.bf16.msra.mxu0 %v647
        %793 = vmatprep.subr.bf16.mxu0 0
        %794 = vmatpush1.bf16.msra.mxu0 %v644
        %795 = vmatprep.subr.bf16.mxu0 0
        %796 = vmatpush2.bf16.msra.mxu0 %v689
        %797 = vmatprep.subr.bf16.mxu0 0
        %798 = vmatpush2.bf16.msra.mxu0 %v686
        %799 = vmatprep.subr.bf16.mxu0 0
        %800 = vmatpush2.bf16.msra.mxu0 %v683
        %801 = vmatprep.subr.bf16.mxu0 0
        %802 = vmatpush2.bf16.msra.mxu0 %v680
        %803 = vmatprep.subr.bf16.mxu0 0
        %804 = vmatpush2.bf16.msra.mxu0 %v677
        %805 = vmatprep.subr.bf16.mxu0 0
        %806 = vmatpush2.bf16.msra.mxu0 %v674
        %807 = vmatprep.subr.bf16.mxu0 0
        %808 = vmatpush2.bf16.msra.mxu0 %v671
        %809 = vmatprep.subr.bf16.mxu0 0
        %810 = vmatpush2.bf16.msra.mxu0 %v668
        %811 = vmatprep.mubr.bf16.mxu0 %v479
        %812 = vmatmul.mubr.bf16.gmra.mxu0 %v478
        %v813 = vpop.f32.mrf.mxu0
        %v814 = vadd.f32 0.0, %v813
        %v815 = vpop.f32.mrf.mxu0
        %v816 = vpop.f32.mrf.mxu0
        %v817 = vpop.f32.mrf.mxu0
        %818 = vdwg.mxu0
        %v819 = vld [vmem:[#allocation6] sm:$0xff]
        %v820 = vld [vmem:[#allocation8] sm:$0xff]
        %v821 = vmul.f32 %v773, %v819
        %822 = vrot.lane.b32.xlu0 %v773, 64
        %v823 = vpop.permute.xlu0 %822
        %v824 = vmul.f32 %v823, %v820
        %v825 = vadd.f32 %v821, %v824
        %v826 = vmul.f32 %v775, %v819
        %827 = vrot.lane.b32.xlu0 %v775, 64
        %v828 = vpop.permute.xlu0 %827
        %v829 = vmul.f32 %v828, %v820
        %v830 = vadd.f32 %v826, %v829
        %v831 = vpack.c.bf16 %v825, %v825
        %v832 = vpack.c.bf16 %v830, %v830
        %833 = vmatprep.subr.bf16.mxu0 0
        %834 = vmatpush1.bf16.xpose.msra.mxu0 0
        %835 = vmatprep.subr.bf16.mxu0 0
        %836 = vmatpush1.bf16.xpose.msra.mxu0 0
        %837 = vmatprep.subr.bf16.mxu0 0
        %838 = vmatpush1.bf16.xpose.msra.mxu0 0
        %839 = vmatprep.subr.bf16.mxu0 0
        %840 = vmatpush1.bf16.xpose.msra.mxu0 0
        %841 = vmatprep.subr.bf16.mxu0 0
        %842 = vmatpush1.bf16.xpose.msra.mxu0 0
        %843 = vmatprep.subr.bf16.mxu0 0
        %844 = vmatpush1.bf16.xpose.msra.mxu0 0
        %845 = vmatprep.subr.bf16.mxu0 0
        %846 = vmatpush1.bf16.xpose.msra.mxu0 0
        %847 = vmatprep.subr.bf16.mxu0 0
        %848 = vmatpush1.bf16.xpose.msra.mxu0 %v832
        %849 = vmatprep.subr.bf16.mxu0 0
        %850 = vmatpush2.bf16.xpose.msra.mxu0 0
        %851 = vmatprep.subr.bf16.mxu0 0
        %852 = vmatpush2.bf16.xpose.msra.mxu0 0
        %853 = vmatprep.subr.bf16.mxu0 0
        %854 = vmatpush2.bf16.xpose.msra.mxu0 0
        %855 = vmatprep.subr.bf16.mxu0 0
        %856 = vmatpush2.bf16.xpose.msra.mxu0 0
        %857 = vmatprep.subr.bf16.mxu0 0
        %858 = vmatpush2.bf16.xpose.msra.mxu0 0
        %859 = vmatprep.subr.bf16.mxu0 0
        %860 = vmatpush2.bf16.xpose.msra.mxu0 0
        %861 = vmatprep.subr.bf16.mxu0 0
        %862 = vmatpush2.bf16.xpose.msra.mxu0 0
        %863 = vmatprep.subr.bf16.mxu0 0
        %864 = vmatpush2.bf16.xpose.msra.mxu0 0
        %865 = vmatprep.mubr.bf16.mxu0 0
        %866 = vmatmul.mubr.bf16.gmra.mxu0 %v831
        %v867 = vpop.f32.mrf.mxu0
        %v868 = vadd.f32 0.0, %v867
        %v869 = vpop.f32.mrf.mxu0
        %v870 = vpop.f32.mrf.mxu0
        %v871 = vpop.f32.mrf.mxu0
        %872 = vdwg.mxu0
        %v873 = vlaneseq
        %v874 = vshrl.u32 %v873, 7
        %v875 = vlaneseq
        %v876 = vand.u32 %v875, 127
        %vm877 = vcmp.le.s32.totalorder %v876, %v874
        %v878 = vsel %vm877, %v868, -1e+30
        %vm879 = vcmask 64512
        %v880 = vsel %vm879, %v878, -inf
        %881 = vmax.xlane.f32.xlu0 %v880
        %v882 = vpop.xlane.xlu0 %881
        %v883 = vsub.f32 %v878, %v882
        %v884 = vmul.f32 %v883, 1.442695
        %v885 = vpow.pop %v884
        %v886 = vsel %vm879, %v885, 0.0
        %887 = vadd.xlane.f32.xlu0 %v886
        %v888 = vpop.xlane.xlu0 %887
        %v889 = vpack.c.bf16 %v885, %v885
        %v890 = vpack.c.bf16 %v814, %v814
        %v892 = vsel %vm879, %v889, 0
        %vm894 = vcmask 1043456
        %v896 = vsel %vm894, %v890, 0
        %898 = vmatprep.subr.bf16.mxu0 0
        %899 = vmatpush1.bf16.msra.mxu0 0
        %900 = vmatprep.subr.bf16.mxu0 0
        %901 = vmatpush1.bf16.msra.mxu0 0
        %902 = vmatprep.subr.bf16.mxu0 0
        %903 = vmatpush1.bf16.msra.mxu0 0
        %904 = vmatprep.subr.bf16.mxu0 0
        %905 = vmatpush1.bf16.msra.mxu0 0
        %906 = vmatprep.subr.bf16.mxu0 0
        %907 = vmatpush1.bf16.msra.mxu0 0
        %908 = vmatprep.subr.bf16.mxu0 0
        %909 = vmatpush1.bf16.msra.mxu0 0
        %910 = vmatprep.subr.bf16.mxu0 0
        %911 = vmatpush1.bf16.msra.mxu0 0
        %912 = vmatprep.subr.bf16.mxu0 0
        %913 = vmatpush1.bf16.msra.mxu0 %v896
        %914 = vmatprep.subr.bf16.mxu0 0
        %915 = vmatpush2.bf16.msra.mxu0 0
        %916 = vmatprep.subr.bf16.mxu0 0
        %917 = vmatpush2.bf16.msra.mxu0 0
        %918 = vmatprep.subr.bf16.mxu0 0
        %919 = vmatpush2.bf16.msra.mxu0 0
        %920 = vmatprep.subr.bf16.mxu0 0
        %921 = vmatpush2.bf16.msra.mxu0 0
        %922 = vmatprep.subr.bf16.mxu0 0
        %923 = vmatpush2.bf16.msra.mxu0 0
        %924 = vmatprep.subr.bf16.mxu0 0
        %925 = vmatpush2.bf16.msra.mxu0 0
        %926 = vmatprep.subr.bf16.mxu0 0
        %927 = vmatpush2.bf16.msra.mxu0 0
        %928 = vmatprep.subr.bf16.mxu0 0
        %929 = vmatpush2.bf16.msra.mxu0 0
        %930 = vmatprep.mubr.bf16.mxu0 0
        %931 = vmatmul.mubr.bf16.gmra.mxu0 %v892
        %v932 = vpop.f32.mrf.mxu0
        %v933 = vadd.f32 0.0, %v932
        %v934 = vpop.f32.mrf.mxu0
        %v935 = vpop.f32.mrf.mxu0
        %v936 = vpop.f32.mrf.mxu0
        %937 = vdwg.mxu0
        %v938 = vrcp.pop %v888
        %v939 = vmul.f32 %v933, %v938
        %v940 = vld [vmem:[%s364] sm:$0xff]
        %v941 = vld [vmem:[%s364 + $0x8] sm:$0xff]
        %v942 = vpack.c.bf16 %v939, %v939
        %v943 = vld [vmem:[%s331] sm:$0xff]
        %v944 = vld [vmem:[%s331 + $0x8] sm:$0xff]
        %v945 = vld [vmem:[%s331 + $0x10] sm:$0xff]
        %v946 = vld [vmem:[%s331 + $0x18] sm:$0xff]
        %v947 = vld [vmem:[%s331 + $0x20] sm:$0xff]
        %v948 = vld [vmem:[%s331 + $0x28] sm:$0xff]
        %v949 = vld [vmem:[%s331 + $0x30] sm:$0xff]
        %v950 = vld [vmem:[%s331 + $0x38] sm:$0xff]
        %v951 = vld [vmem:[%s331 + $0x40] sm:$0xff]
        %v952 = vld [vmem:[%s331 + $0x48] sm:$0xff]
        %v953 = vld [vmem:[%s331 + $0x50] sm:$0xff]
        %v954 = vld [vmem:[%s331 + $0x58] sm:$0xff]
        %v955 = vld [vmem:[%s331 + $0x60] sm:$0xff]
        %v956 = vld [vmem:[%s331 + $0x68] sm:$0xff]
        %v957 = vld [vmem:[%s331 + $0x70] sm:$0xff]
        %v958 = vld [vmem:[%s331 + $0x78] sm:$0xff]
        %v975 = vunpack.c.l.b16 %v943
        %v976 = vunpack.c.h.b16 %v943
        %v977 = vunpack.c.l.b16 %v944
        %v978 = vunpack.c.h.b16 %v944
        %v979 = vunpack.c.l.b16 %v945
        %v980 = vunpack.c.h.b16 %v945
        %v981 = vunpack.c.l.b16 %v946
        %v982 = vunpack.c.h.b16 %v946
        %v983 = vunpack.c.l.b16 %v947
        %v984 = vunpack.c.h.b16 %v947
        %v985 = vunpack.c.l.b16 %v948
        %v986 = vunpack.c.h.b16 %v948
        %v987 = vunpack.c.l.b16 %v949
        %v988 = vunpack.c.h.b16 %v949
        %v989 = vunpack.c.l.b16 %v950
        %v990 = vunpack.c.h.b16 %v950
        %v991 = vunpack.c.l.b16 %v951
        %v992 = vunpack.c.h.b16 %v951
        %v993 = vunpack.c.l.b16 %v952
        %v994 = vunpack.c.h.b16 %v952
        %v995 = vunpack.c.l.b16 %v953
        %v996 = vunpack.c.h.b16 %v953
        %v997 = vunpack.c.l.b16 %v954
        %v998 = vunpack.c.h.b16 %v954
        %v999 = vunpack.c.l.b16 %v955
        %v1000 = vunpack.c.h.b16 %v955
        %v1001 = vunpack.c.l.b16 %v956
        %v1002 = vunpack.c.h.b16 %v956
        %v1003 = vunpack.c.l.b16 %v957
        %v1004 = vunpack.c.h.b16 %v957
        %v1005 = vunpack.c.l.b16 %v958
        %v1006 = vunpack.c.h.b16 %v958
        %v1007 = vpack.c.b16 %v977, %v975
        %v1008 = vpack.c.b16 %v978, %v976
        %v1009 = vpack.c.b16 %v981, %v979
        %v1010 = vpack.c.b16 %v982, %v980
        %v1011 = vpack.c.b16 %v985, %v983
        %v1012 = vpack.c.b16 %v986, %v984
        %v1013 = vpack.c.b16 %v989, %v987
        %v1014 = vpack.c.b16 %v990, %v988
        %v1015 = vpack.c.b16 %v993, %v991
        %v1016 = vpack.c.b16 %v994, %v992
        %v1017 = vpack.c.b16 %v997, %v995
        %v1018 = vpack.c.b16 %v998, %v996
        %v1019 = vpack.c.b16 %v1001, %v999
        %v1020 = vpack.c.b16 %v1002, %v1000
        %v1021 = vpack.c.b16 %v1005, %v1003
        %v1022 = vpack.c.b16 %v1006, %v1004
        %1039 = vmatprep.subr.bf16.mxu0 %v1022
        %1040 = vmatpush1.bf16.msra.mxu0 %v1021
        %1041 = vmatprep.subr.bf16.mxu0 %v1020
        %1042 = vmatpush1.bf16.msra.mxu0 %v1019
        %1043 = vmatprep.subr.bf16.mxu0 %v1018
        %1044 = vmatpush1.bf16.msra.mxu0 %v1017
        %1045 = vmatprep.subr.bf16.mxu0 %v1016
        %1046 = vmatpush1.bf16.msra.mxu0 %v1015
        %1047 = vmatprep.subr.bf16.mxu0 %v1014
        %1048 = vmatpush1.bf16.msra.mxu0 %v1013
        %1049 = vmatprep.subr.bf16.mxu0 %v1012
        %1050 = vmatpush1.bf16.msra.mxu0 %v1011
        %1051 = vmatprep.subr.bf16.mxu0 %v1010
        %1052 = vmatpush1.bf16.msra.mxu0 %v1009
        %1053 = vmatprep.subr.bf16.mxu0 %v1008
        %1054 = vmatpush1.bf16.msra.mxu0 %v1007
        %1055 = vmatprep.subr.bf16.mxu0 0
        %1056 = vmatpush2.bf16.msra.mxu0 0
        %1057 = vmatprep.subr.bf16.mxu0 0
        %1058 = vmatpush2.bf16.msra.mxu0 0
        %1059 = vmatprep.subr.bf16.mxu0 0
        %1060 = vmatpush2.bf16.msra.mxu0 0
        %1061 = vmatprep.subr.bf16.mxu0 0
        %1062 = vmatpush2.bf16.msra.mxu0 0
        %1063 = vmatprep.subr.bf16.mxu0 0
        %1064 = vmatpush2.bf16.msra.mxu0 0
        %1065 = vmatprep.subr.bf16.mxu0 0
        %1066 = vmatpush2.bf16.msra.mxu0 0
        %1067 = vmatprep.subr.bf16.mxu0 0
        %1068 = vmatpush2.bf16.msra.mxu0 0
        %1069 = vmatprep.subr.bf16.mxu0 0
        %1070 = vmatpush2.bf16.msra.mxu0 0
        %1071 = vmatprep.mubr.bf16.mxu0 0
        %1072 = vmatmul.mubr.bf16.gmra.mxu0 %v942
        %v1073 = vpop.f32.mrf.mxu0
        %v1074 = vadd.f32 0.0, %v1073
        %v1075 = vpop.f32.mrf.mxu0
        %v1076 = vadd.f32 0.0, %v1075
        %v1077 = vpop.f32.mrf.mxu0
        %v1078 = vpop.f32.mrf.mxu0
        %1079 = vdwg.mxu0
        %v1080 = vadd.f32 %v940, %v1074
        %v1081 = vadd.f32 %v941, %v1076
        %1082 = vst [vmem:[%s364] sm:$0xff] %v1080
        %1083 = vst [vmem:[%s364 + $0x8] sm:$0xff] %v1081
        %s1084 = sand.u32 %s186, 1
        %s1085 = scalar_lea.sflag [#allocation5], %s1084
        %s1086 = sand.u32 %s186, 1
        %s1087 = smul.addr %s1086, 16
        %s1088 = scalar_lea.vmem [#allocation12], %s1087
        // Predicated region
        $region69: #{tpu_custom_call.1} parent=43 // pred_check
          %p1089 = pneg %p196
        $region70: #{tpu_custom_call.1} parent=43 // pred_check_branch
          %1091 = sbr.rel (%p1089) target = $region72
        $region71: #{tpu_custom_call.1} parent=43 // pred_region
          %s1093 = ssub.s32 256, 256
          %1094 = vsyncadd %s1085, %s1093
          %s1095 = smul.addr %s29, 2
          %s1096 = smul.addr %s1095, 128
          %s1097 = scalar_lea.hbm %s6, %s1096
          %s1099 = sshll.u32 %s1088, 4
          %s1100 = int_to_ptr.vmem [resolvable:$true] %s1099
          %1102 = dma.vmem_to_hbm [thread:$0]  %s1100, 256, %s1097, %s1085
        $region72: #{tpu_custom_call.1} parent=43 // pred_fallthru
          _
      $region44: #{tpu_custom_call.1} parent=5 // pred_fallthru
        _
      %p1103 = scmp.le.s32.totalorder 2, %s20
      // Predicated region
      $region73: #{tpu_custom_call.1} parent=5 // pred_check
        %p1104 = pneg %p1103
      $region74: #{tpu_custom_call.1} parent=5 // pred_check_branch
        %1106 = sbr.rel (%p1104) target = $region76
      $region75: #{tpu_custom_call.1} parent=5 // pred_region
        %s1107 = ssub.s32 %s20, 2
        // Predicated region
        $region77: #{tpu_custom_call.1} parent=75 // pred_check
          %p1108 = pneg %p202
        $region78: #{tpu_custom_call.1} parent=75 // pred_check_branch
          %1110 = sbr.rel (%p1108) target = $region80
        $region79: #{tpu_custom_call.1} parent=75 // pred_region
          %s1111 = sand.u32 %s187, 1
          %s1112 = scalar_lea.sflag [#allocation5], %s1111
          %s1113 = sand.u32 %s187, 1
          %s1114 = smul.addr %s1113, 16
          %s1115 = scalar_lea.vmem [#allocation12], %s1114
          %1116 = dma.done %s1112, 256
        $region80: #{tpu_custom_call.1} parent=75 // pred_fallthru
          _
      $region76: #{tpu_custom_call.1} parent=5 // pred_fallthru
        _
    $region6: #{tpu_custom_call.1} parent=1 // loop_footer
      %s24 = sadd.s32 1, %s20
    $region7: #{tpu_custom_call.1} parent=1 // loop_footer_branch
      %19 = sbr.rel target = $region3
    $region8: #{tpu_custom_call.1} parent=1 // loop_exit
      _
    %1117 = vsyncpa [#allocation4], 1
    %s1118 = scalar_lea.sflag [#allocation4], 1
    %1119 = vsyncpa %s1118, 1
    %1120 = vsyncpa [#allocation7], 1
    %1121 = vsyncpa [#allocation10], 1
    %s1122 = scalar_lea.sflag [#allocation10], 1
    %1123 = vsyncpa %s1122, 1
    %1124 = vsyncpa [#allocation5], 1
    %s1125 = scalar_lea.sflag [#allocation5], 1
    %1126 = vsyncpa %s1125, 1

// kernel: tpu_custom_call.1
$region0: #{tpu_custom_call.1}
  #allocation0 [shape = 'u32[]', space=smem, size = 0x4, offset = 0x4, fixed_abs, tag = 'smem constant byte address 0x4 - core index']
  #allocation1 [shape = 'u32[144,128]{1,0:T(1,128)}', space=vmem, size = 0x12000, scoped, tag = 'internal scratch']
  #allocation2 [shape = 'bf16[8,256]{1,0:T(8,128)(2,1)}', space=vmem, size = 0x1000, scoped, tag = 'scratch operand']
  %s0 = inlined_call_operand.hbm [shape: f32[2,8,256], index: 0, kind: input, shape index: {}]
  %s1 = inlined_call_operand.hbm [shape: f32[8,128], index: 1, kind: input, shape index: {}]
  %s2 = inlined_call_operand.hbm [shape: f32[8,128], index: 2, kind: input, shape index: {}]
  %s3 = inlined_call_operand.vmem [shape: f32[1,256], index: 3, kind: input, shape index: {}]
  %s4 = inlined_call_operand.hbm [shape: bf16[2,256,384], index: 4, kind: input, shape index: {}]
  %s5 = inlined_call_operand.hbm [shape: bf16[2,128,256], index: 5, kind: input, shape index: {}]
  %s6 = inlined_call_operand.hbm [shape: f32[2,8,256], index: 6, kind: output, shape index: {}]
  %s7 = sld [smem:[#allocation0]]
  $region81: #{tpu_custom_call.1} parent=0
    _
  %s9 = ssub.s32 1, %s7
  %s10 = scalar_select 0, %s9, %s7
  $region1: #{tpu_custom_call.1} parent=0
    #allocation3 [shape = 'u8[16384]{0}', space=vmem, size = 0x4000, scoped, tag = 'input window, operand 0']
    #allocation4 [shape = 's32[2]{0}', space=sflag, size = 0x8, scoped, tag = 'scoped memory for tpu_custom_call.1']
    #allocation5 [shape = 's32[2]{0}', space=sflag, size = 0x8, scoped, tag = 'scoped memory for tpu_custom_call.1']
    #allocation6 [shape = 'u8[4096]{0}', space=vmem, size = 0x1000, scoped, tag = 'input window, operand 1, single buffered']
    #allocation7 [shape = 's32[1]{0}', space=sflag, size = 0x4, scoped, tag = 'scoped memory for tpu_custom_call.1']
    #allocation8 [shape = 'u8[4096]{0}', space=vmem, size = 0x1000, scoped, tag = 'input window, operand 2, single buffered']
    #allocation9 [shape = 'u8[393216]{0}', space=vmem, size = 0x60000, scoped, tag = 'input window, operand 4']
    #allocation10 [shape = 's32[2]{0}', space=sflag, size = 0x8, scoped, tag = 'scoped memory for tpu_custom_call.1']
    #allocation11 [shape = 'u8[131072]{0}', space=vmem, size = 0x20000, scoped, tag = 'input window, operand 5']
    #allocation12 [shape = 'u8[16384]{0}', space=vmem, size = 0x4000, scoped, tag = 'output window, operand 0']
    %11 = vsyncpa [#allocation4], 0
    %s12 = scalar_lea.sflag [#allocation4], 1
    %13 = vsyncpa %s12, 0
    %14 = vsyncpa [#allocation7], 0
    %15 = vsyncpa [#allocation10], 0
    %s16 = scalar_lea.sflag [#allocation10], 1
    %17 = vsyncpa %s16, 0
    %18 = vsyncpa [#allocation5], 0
    %s19 = scalar_lea.sflag [#allocation5], 1
    %20 = vsyncpa %s19, 0
    loop: start=0, step=1, limit=6
    $region2: #{tpu_custom_call.1} parent=1 // loop_pre_header
      _
    $region3: #{tpu_custom_call.1} parent=1 // loop_header
      %s22 = sphi 0, %s26
      %p23 = scmp.ge.s32.totalorder %s22, 6
      %s29 = sphi 0, %s41
      %s30 = sphi 0, %s37
      %s31 = sphi 0, %s29
      %s32 = sphi 0, %s30
      %s33 = sphi 0, %s31
      %s34 = sphi 0, %s32
      %s44 = sphi 0, %s46
      %s47 = sphi 0, %s44
      %s48 = sphi 0, %s47
      %s64 = sphi 0, %s48
      %s68 = sphi 0, %s68
      %s70 = sphi 0, %s68
      %s71 = sphi 0, %s70
      %s85 = sphi 0, %s71
      %s89 = sphi 0, %s89
      %s91 = sphi 0, %s89
      %s92 = sphi 0, %s91
      %s106 = sphi 0, %s92
      %s110 = sphi 0, %s110
      %s112 = sphi 0, %s110
      %s113 = sphi 0, %s112
      %s127 = sphi 0, %s113
      %s133 = sphi 0, %s135
      %s136 = sphi 0, %s133
      %s137 = sphi 0, %s136
      %s153 = sphi 0, %s137
      %s159 = sphi 0, %s161
      %s162 = sphi 0, %s159
      %s163 = sphi 0, %s162
      %s179 = sphi 0, %s163
      %s185 = sphi 0, %s187
      %s188 = sphi 0, %s185
      %s189 = sphi 0, %s188
      %s205 = sphi 0, %s189
    $region4: #{tpu_custom_call.1} parent=1 // loop_header_branch
      %25 = sbr.rel (%p23) target = $region8
    $region5: #{tpu_custom_call.1} parent=1 // loop_body
      %s27 = ssub.s32 %s22, 1
      %s28 = ssub.s32 %s22, 2
      %s35 = sadd.s32 1, %s30
      %p36 = scmp.ge.s32.totalorder %s35, 2
      %s37 = scalar_select %p36, 0, %s35
      %s38 = sadd.s32 1, %s29
      %s39 = scalar_select %p36, %s38, %s29
      %p40 = scmp.ge.s32.totalorder %s39, 2
      %s41 = scalar_select %p40, 0, %s39
      %s42 = ssub.s32 %s29, %s41
      %p43 = scmp.eq.s32.totalorder %s42, 0
      %s45 = sadd.s32 %s44, 1
      %s46 = scalar_select %p43, %s44, %s45
      %p49 = pneg %p43
      %p50 = scmp.eq.s32.totalorder %s22, 3
      %p51 = por %p49, %p50
      %p52 = scmp.ne.s32.totalorder %s44, %s47
      %p53 = scmp.eq.s32.totalorder %s22, 0
      %p54 = por %p52, %p53
      %p55 = scmp.ne.s32.totalorder %s44, %s47
      %p56 = scmp.eq.s32.totalorder %s27, 3
      %p57 = por %p55, %p56
      %p58 = scmp.ne.s32.totalorder %s47, %s48
      %p59 = scmp.eq.s32.totalorder %s27, 0
      %p60 = por %p58, %p59
      %p61 = scmp.ne.s32.totalorder %s47, %s48
      %p62 = scmp.eq.s32.totalorder %s28, 3
      %p63 = por %p61, %p62
      %p65 = scmp.ne.s32.totalorder %s48, %s64
      %p66 = scmp.eq.s32.totalorder %s28, 0
      %p67 = por %p65, %p66
      %s69 = sadd.s32 %s68, 1
      %p72 = scmp.eq.s32.totalorder %s22, 3
      %p73 = scmp.ne.s32.totalorder %s68, %s70
      %p74 = scmp.eq.s32.totalorder %s22, 0
      %p75 = por %p73, %p74
      %p76 = scmp.ne.s32.totalorder %s68, %s70
      %p77 = scmp.eq.s32.totalorder %s27, 3
      %p78 = por %p76, %p77
      %p79 = scmp.ne.s32.totalorder %s70, %s71
      %p80 = scmp.eq.s32.totalorder %s27, 0
      %p81 = por %p79, %p80
      %p82 = scmp.ne.s32.totalorder %s70, %s71
      %p83 = scmp.eq.s32.totalorder %s28, 3
      %p84 = por %p82, %p83
      %p86 = scmp.ne.s32.totalorder %s71, %s85
      %p87 = scmp.eq.s32.totalorder %s28, 0
      %p88 = por %p86, %p87
      %s90 = sadd.s32 %s89, 1
      %p93 = scmp.eq.s32.totalorder %s22, 3
      %p94 = scmp.ne.s32.totalorder %s89, %s91
      %p95 = scmp.eq.s32.totalorder %s22, 0
      %p96 = por %p94, %p95
      %p97 = scmp.ne.s32.totalorder %s89, %s91
      %p98 = scmp.eq.s32.totalorder %s27, 3
      %p99 = por %p97, %p98
      %p100 = scmp.ne.s32.totalorder %s91, %s92
      %p101 = scmp.eq.s32.totalorder %s27, 0
      %p102 = por %p100, %p101
      %p103 = scmp.ne.s32.totalorder %s91, %s92
      %p104 = scmp.eq.s32.totalorder %s28, 3
      %p105 = por %p103, %p104
      %p107 = scmp.ne.s32.totalorder %s92, %s106
      %p108 = scmp.eq.s32.totalorder %s28, 0
      %p109 = por %p107, %p108
      %s111 = sadd.s32 %s110, 1
      %p114 = scmp.eq.s32.totalorder %s22, 3
      %p115 = scmp.ne.s32.totalorder %s110, %s112
      %p116 = scmp.eq.s32.totalorder %s22, 0
      %p117 = por %p115, %p116
      %p118 = scmp.ne.s32.totalorder %s110, %s112
      %p119 = scmp.eq.s32.totalorder %s27, 3
      %p120 = por %p118, %p119
      %p121 = scmp.ne.s32.totalorder %s112, %s113
      %p122 = scmp.eq.s32.totalorder %s27, 0
      %p123 = por %p121, %p122
      %p124 = scmp.ne.s32.totalorder %s112, %s113
      %p125 = scmp.eq.s32.totalorder %s28, 3
      %p126 = por %p124, %p125
      %p128 = scmp.ne.s32.totalorder %s113, %s127
      %p129 = scmp.eq.s32.totalorder %s28, 0
      %p130 = por %p128, %p129
      %s131 = ssub.s32 %s30, %s37
      %p132 = scmp.eq.s32.totalorder %s131, 0
      %s134 = sadd.s32 %s133, 1
      %s135 = scalar_select %p132, %s133, %s134
      %p138 = pneg %p132
      %p139 = scmp.eq.s32.totalorder %s22, 3
      %p140 = por %p138, %p139
      %p141 = scmp.ne.s32.totalorder %s133, %s136
      %p142 = scmp.eq.s32.totalorder %s22, 0
      %p143 = por %p141, %p142
      %p144 = scmp.ne.s32.totalorder %s133, %s136
      %p145 = scmp.eq.s32.totalorder %s27, 3
      %p146 = por %p144, %p145
      %p147 = scmp.ne.s32.totalorder %s136, %s137
      %p148 = scmp.eq.s32.totalorder %s27, 0
      %p149 = por %p147, %p148
      %p150 = scmp.ne.s32.totalorder %s136, %s137
      %p151 = scmp.eq.s32.totalorder %s28, 3
      %p152 = por %p150, %p151
      %p154 = scmp.ne.s32.totalorder %s137, %s153
      %p155 = scmp.eq.s32.totalorder %s28, 0
      %p156 = por %p154, %p155
      %s157 = ssub.s32 %s30, %s37
      %p158 = scmp.eq.s32.totalorder %s157, 0
      %s160 = sadd.s32 %s159, 1
      %s161 = scalar_select %p158, %s159, %s160
      %p164 = pneg %p158
      %p165 = scmp.eq.s32.totalorder %s22, 3
      %p166 = por %p164, %p165
      %p167 = scmp.ne.s32.totalorder %s159, %s162
      %p168 = scmp.eq.s32.totalorder %s22, 0
      %p169 = por %p167, %p168
      %p170 = scmp.ne.s32.totalorder %s159, %s162
      %p171 = scmp.eq.s32.totalorder %s27, 3
      %p172 = por %p170, %p171
      %p173 = scmp.ne.s32.totalorder %s162, %s163
      %p174 = scmp.eq.s32.totalorder %s27, 0
      %p175 = por %p173, %p174
      %p176 = scmp.ne.s32.totalorder %s162, %s163
      %p177 = scmp.eq.s32.totalorder %s28, 3
      %p178 = por %p176, %p177
      %p180 = scmp.ne.s32.totalorder %s163, %s179
      %p181 = scmp.eq.s32.totalorder %s28, 0
      %p182 = por %p180, %p181
      %s183 = ssub.s32 %s29, %s41
      %p184 = scmp.eq.s32.totalorder %s183, 0
      %s186 = sadd.s32 %s185, 1
      %s187 = scalar_select %p184, %s185, %s186
      %p190 = pneg %p184
      %p191 = scmp.eq.s32.totalorder %s22, 3
      %p192 = por %p190, %p191
      %p193 = scmp.ne.s32.totalorder %s185, %s188
      %p194 = scmp.eq.s32.totalorder %s22, 0
      %p195 = por %p193, %p194
      %p196 = scmp.ne.s32.totalorder %s185, %s188
      %p197 = scmp.eq.s32.totalorder %s27, 3
      %p198 = por %p196, %p197
      %p199 = scmp.ne.s32.totalorder %s188, %s189
      %p200 = scmp.eq.s32.totalorder %s27, 0
      %p201 = por %p199, %p200
      %p202 = scmp.ne.s32.totalorder %s188, %s189
      %p203 = scmp.eq.s32.totalorder %s28, 3
      %p204 = por %p202, %p203
      %p206 = scmp.ne.s32.totalorder %s189, %s205
      %p207 = scmp.eq.s32.totalorder %s28, 0
      %p208 = por %p206, %p207
      %p209 = scmp.le.s32.totalorder 1, %s22
      %p210 = scmp.lt.s32.totalorder %s22, 5
      %p211 = pnand %p209, %p210
      %p212 = pneg %p211
      // Predicated region
      $region9: #{tpu_custom_call.1} parent=5 // pred_check
        _
      $region10: #{tpu_custom_call.1} parent=5 // pred_check_branch
        %214 = sbr.rel (%p211) target = $region12
      $region11: #{tpu_custom_call.1} parent=5 // pred_region
        %s215 = ssub.s32 %s22, 1
        // Predicated region
        $region13: #{tpu_custom_call.1} parent=11 // pred_check
          %p216 = pneg %p81
        $region14: #{tpu_custom_call.1} parent=11 // pred_check_branch
          %218 = sbr.rel (%p216) target = $region16
        $region15: #{tpu_custom_call.1} parent=11 // pred_region
          %s220 = ssub.s32 128, 128
          %221 = vsyncadd [#allocation7], %s220
          %s223 = sshll.u32 [#allocation6], 4
          %s224 = int_to_ptr.vmem [resolvable:$true] %s223
          %226 = dma.hbm_to_vmem [thread:$0]  %s1, 128, %s224, [#allocation7]
        $region16: #{tpu_custom_call.1} parent=11 // pred_fallthru
          _
        // Predicated region
        $region17: #{tpu_custom_call.1} parent=11 // pred_check
          %p227 = pneg %p102
        $region18: #{tpu_custom_call.1} parent=11 // pred_check_branch
          %229 = sbr.rel (%p227) target = $region20
        $region19: #{tpu_custom_call.1} parent=11 // pred_region
          %s231 = ssub.s32 128, 128
          %232 = vsyncadd [#allocation7], %s231
          %s234 = sshll.u32 [#allocation8], 4
          %s235 = int_to_ptr.vmem [resolvable:$true] %s234
          %237 = dma.hbm_to_vmem [thread:$0]  %s2, 128, %s235, [#allocation7]
        $region20: #{tpu_custom_call.1} parent=11 // pred_fallthru
          _
        // Predicated region
        $region21: #{tpu_custom_call.1} parent=11 // pred_check
          %p238 = pneg %p123
        $region22: #{tpu_custom_call.1} parent=11 // pred_check_branch
          %240 = sbr.rel (%p238) target = $region24
        $region23: #{tpu_custom_call.1} parent=11 // pred_region
          _
        $region24: #{tpu_custom_call.1} parent=11 // pred_fallthru
          _
      $region12: #{tpu_custom_call.1} parent=5 // pred_fallthru
        _
      %p241 = scmp.lt.s32.totalorder %s22, 4
      // Predicated region
      $region25: #{tpu_custom_call.1} parent=5 // pred_check
        %p242 = pneg %p241
      $region26: #{tpu_custom_call.1} parent=5 // pred_check_branch
        %244 = sbr.rel (%p242) target = $region28
      $region27: #{tpu_custom_call.1} parent=5 // pred_region
        // Predicated region
        $region29: #{tpu_custom_call.1} parent=27 // pred_check
          %p245 = pneg %p54
        $region30: #{tpu_custom_call.1} parent=27 // pred_check_branch
          %247 = sbr.rel (%p245) target = $region32
        $region31: #{tpu_custom_call.1} parent=27 // pred_region
          %s248 = sand.u32 %s44, 1
          %s249 = scalar_lea.sflag [#allocation4], %s248
          %s250 = sand.u32 %s44, 1
          %s251 = smul.addr %s250, 16
          %s252 = scalar_lea.vmem [#allocation3], %s251
          %s254 = ssub.s32 256, 256
          %255 = vsyncadd %s249, %s254
          %s256 = smul.addr %s29, 2
          %s257 = smul.addr %s256, 128
          %s258 = scalar_lea.hbm %s0, %s257
          %s260 = sshll.u32 %s252, 4
          %s261 = int_to_ptr.vmem [resolvable:$true] %s260
          %263 = dma.hbm_to_vmem [thread:$0]  %s258, 256, %s261, %s249
        $region32: #{tpu_custom_call.1} parent=27 // pred_fallthru
          _
        // Predicated region
        $region33: #{tpu_custom_call.1} parent=27 // pred_check
          %p264 = pneg %p143
        $region34: #{tpu_custom_call.1} parent=27 // pred_check_branch
          %266 = sbr.rel (%p264) target = $region36
        $region35: #{tpu_custom_call.1} parent=27 // pred_region
          %s267 = sand.u32 %s22, 1
          %s268 = scalar_lea.sflag [#allocation10], %s267
          %s269 = sand.u32 %s133, 1
          %s270 = smul.addr %s269, 384
          %s271 = scalar_lea.vmem [#allocation9], %s270
          %s273 = ssub.s32 6144, 6144
          %274 = vsyncadd %s268, %s273
          %s275 = smul.addr %s30, 96
          %s276 = smul.addr %s275, 64
          %s277 = scalar_lea.hbm %s4, %s276
          %s278 = sshll.u32 %s271, 4
          %s279 = int_to_ptr.vmem [resolvable:$true] %s278
          %284 = dma.hbm_to_vmem [thread:$0]  %s277, 6144, %s279, %s268, 192, 192, 12
        $region36: #{tpu_custom_call.1} parent=27 // pred_fallthru
          _
        // Predicated region
        $region37: #{tpu_custom_call.1} parent=27 // pred_check
          %p285 = pneg %p169
        $region38: #{tpu_custom_call.1} parent=27 // pred_check_branch
          %287 = sbr.rel (%p285) target = $region40
        $region39: #{tpu_custom_call.1} parent=27 // pred_region
          %s288 = sand.u32 %s22, 1
          %s289 = scalar_lea.sflag [#allocation10], %s288
          %s290 = sand.u32 %s159, 1
          %s291 = smul.addr %s290, 128
          %s292 = scalar_lea.vmem [#allocation11], %s291
          %s294 = ssub.s32 2048, 2048
          %295 = vsyncadd %s289, %s294
          %s296 = smul.addr %s30, 32
          %s297 = smul.addr %s296, 64
          %s298 = scalar_lea.hbm %s5, %s297
          %s299 = sshll.u32 %s292, 4
          %s300 = int_to_ptr.vmem [resolvable:$true] %s299
          %305 = dma.hbm_to_vmem [thread:$0]  %s298, 2048, %s300, %s289, 128, 128, 8
        $region40: #{tpu_custom_call.1} parent=27 // pred_fallthru
          _
      $region28: #{tpu_custom_call.1} parent=5 // pred_fallthru
        _
      %p306 = scmp.le.s32.totalorder 1, %s22
      %p307 = scmp.lt.s32.totalorder %s22, 5
      %p308 = pnand %p306, %p307
      %p309 = pneg %p308
      // Predicated region
      $region41: #{tpu_custom_call.1} parent=5 // pred_check
        _
      $region42: #{tpu_custom_call.1} parent=5 // pred_check_branch
        %311 = sbr.rel (%p308) target = $region44
      $region43: #{tpu_custom_call.1} parent=5 // pred_region
        %s312 = ssub.s32 %s22, 1
        %s313 = sand.u32 %s47, 1
        %s314 = scalar_lea.sflag [#allocation4], %s313
        %s315 = sand.u32 %s47, 1
        %s316 = smul.addr %s315, 16
        %s317 = scalar_lea.vmem [#allocation3], %s316
        // Predicated region
        $region45: #{tpu_custom_call.1} parent=43 // pred_check
          %p318 = pneg %p60
        $region46: #{tpu_custom_call.1} parent=43 // pred_check_branch
          %320 = sbr.rel (%p318) target = $region48
        $region47: #{tpu_custom_call.1} parent=43 // pred_region
          %321 = dma.done %s314, 256
        $region48: #{tpu_custom_call.1} parent=43 // pred_fallthru
          _
        // Predicated region
        $region49: #{tpu_custom_call.1} parent=43 // pred_check
          %p322 = pneg %p81
        $region50: #{tpu_custom_call.1} parent=43 // pred_check_branch
          %324 = sbr.rel (%p322) target = $region52
        $region51: #{tpu_custom_call.1} parent=43 // pred_region
          %325 = dma.done [#allocation7], 128
        $region52: #{tpu_custom_call.1} parent=43 // pred_fallthru
          _
        // Predicated region
        $region53: #{tpu_custom_call.1} parent=43 // pred_check
          %p326 = pneg %p102
        $region54: #{tpu_custom_call.1} parent=43 // pred_check_branch
          %328 = sbr.rel (%p326) target = $region56
        $region55: #{tpu_custom_call.1} parent=43 // pred_region
          %329 = dma.done [#allocation7], 128
        $region56: #{tpu_custom_call.1} parent=43 // pred_fallthru
          _
        %s330 = sand.u32 %s27, 1
        %s331 = scalar_lea.sflag [#allocation10], %s330
        %s332 = sand.u32 %s136, 1
        %s333 = smul.addr %s332, 384
        %s334 = scalar_lea.vmem [#allocation9], %s333
        // Predicated region
        $region57: #{tpu_custom_call.1} parent=43 // pred_check
          %p335 = pneg %p149
        $region58: #{tpu_custom_call.1} parent=43 // pred_check_branch
          %337 = sbr.rel (%p335) target = $region60
        $region59: #{tpu_custom_call.1} parent=43 // pred_region
          %338 = dma.done %s331, 6144
        $region60: #{tpu_custom_call.1} parent=43 // pred_fallthru
          _
        %s339 = sand.u32 %s27, 1
        %s340 = scalar_lea.sflag [#allocation10], %s339
        %s341 = sand.u32 %s162, 1
        %s342 = smul.addr %s341, 128
        %s343 = scalar_lea.vmem [#allocation11], %s342
        // Predicated region
        $region61: #{tpu_custom_call.1} parent=43 // pred_check
          %p344 = pneg %p175
        $region62: #{tpu_custom_call.1} parent=43 // pred_check_branch
          %346 = sbr.rel (%p344) target = $region64
        $region63: #{tpu_custom_call.1} parent=43 // pred_region
          %347 = dma.done %s340, 2048
        $region64: #{tpu_custom_call.1} parent=43 // pred_fallthru
          _
        %s348 = sand.u32 %s47, 1
        %s349 = scalar_lea.sflag [#allocation4], %s348
        %s350 = sand.u32 %s47, 1
        %s351 = smul.addr %s350, 16
        %s352 = scalar_lea.vmem [#allocation3], %s351
        %p353 = pneg %p60
        %p354 = pneg %p57
        %p355 = pneg %p81
        %p356 = pneg %p78
        %p357 = pneg %p102
        %p358 = pneg %p99
        %p359 = pneg %p123
        %p360 = pneg %p120
        %s361 = sand.u32 %s27, 1
        %s362 = scalar_lea.sflag [#allocation10], %s361
        %s363 = sand.u32 %s136, 1
        %s364 = smul.addr %s363, 384
        %s365 = scalar_lea.vmem [#allocation9], %s364
        %p366 = pneg %p149
        %p367 = pneg %p146
        %s368 = sand.u32 %s27, 1
        %s369 = scalar_lea.sflag [#allocation10], %s368
        %s370 = sand.u32 %s162, 1
        %s371 = smul.addr %s370, 128
        %s372 = scalar_lea.vmem [#allocation11], %s371
        %p373 = pneg %p175
        %p374 = pneg %p172
        %p375 = pneg %p201
        %p376 = pneg %p198
        %s377 = sand.u32 %s188, 1
        %s378 = scalar_lea.sflag [#allocation5], %s377
        %s379 = sand.u32 %s188, 1
        %s380 = smul.addr %s379, 16
        %s381 = scalar_lea.vmem [#allocation12], %s380
        %p383 = scmp.eq.s32.totalorder %s32, 0
        // Predicated region
        $region65: #{tpu_custom_call.1} parent=43 // pred_check
          %p384 = pneg %p383
        $region66: #{tpu_custom_call.1} parent=43 // pred_check_branch
          %386 = sbr.rel (%p384) target = $region68
        $region67: #{tpu_custom_call.1} parent=43 // pred_region
          %v387 = vld [vmem:[%s317] sm:$0xff]
          %v388 = vld [vmem:[%s317 + $0x8] sm:$0xff]
          %v389 = vld [vmem:[%s3] sm:$0x3]
          %v390 = vmul.f32 %v387, %v387
          %v391 = vmul.f32 %v388, %v388
          %v392 = vadd.f32 %v390, %v391
          %393 = vadd.xlane.f32.xlu0 %v392
          %v394 = vpop.xlane.xlu0 %393
          %v395 = vrcp.pop 256.0
          %v396 = vmul.f32 %v394, %v395
          %v397 = vadd.f32 %v396, 1e-06
          %v398 = vrsqrt.pop %v397
          %v399 = vmul.f32 %v387, %v398
          %v400 = vmul.f32 %v388, %v398
          %v402 = vlaneseq
          %v403 = vshrl.u32 %v402, 7
          %v404 = vsub.s32 0, %v403
          %v405 = vrot.slane %v389, %v404
          %v406 = vlaneseq
          %v407 = vshrl.u32 %v406, 7
          %v408 = vsub.s32 1, %v407
          %v409 = vrot.slane %v389, %v408
          %v412 = vmul.f32 %v399, %v405
          %v413 = vmul.f32 %v400, %v409
          %v414 = vpack.c.bf16 %v412, %v412
          %v415 = vpack.c.bf16 %v413, %v413
          %v418 = vunpack.c.l.b16 %v414
          %v419 = vunpack.c.l.b16 %v415
          %v420 = vpack.c.b16 %v419, %v418
          %422 = vst [vmem:[#allocation2] sm:$0xff] %v420
          %v423 = vld [vmem:[%s317] sm:$0xff]
          %v424 = vld [vmem:[%s317 + $0x8] sm:$0xff]
          %425 = vst [vmem:[%s381] sm:$0xff] %v423
          %426 = vst [vmem:[%s381 + $0x8] sm:$0xff] %v424
        $region68: #{tpu_custom_call.1} parent=43 // pred_fallthru
          _
        %v427 = vld [vmem:[#allocation2] sm:$0xff]
        %v428 = vld [vmem:[%s334] sm:$0xff]
        %v429 = vld [vmem:[%s334 + $0x8] sm:$0xf]
        %v430 = vld [vmem:[%s334 + $0xc] sm:$0xff]
        %v431 = vld [vmem:[%s334 + $0x14] sm:$0xf]
        %v432 = vld [vmem:[%s334 + $0x18] sm:$0xff]
        %v433 = vld [vmem:[%s334 + $0x20] sm:$0xf]
        %v434 = vld [vmem:[%s334 + $0x24] sm:$0xff]
        %v435 = vld [vmem:[%s334 + $0x2c] sm:$0xf]
        %v436 = vld [vmem:[%s334 + $0x30] sm:$0xff]
        %v437 = vld [vmem:[%s334 + $0x38] sm:$0xf]
        %v438 = vld [vmem:[%s334 + $0x3c] sm:$0xff]
        %v439 = vld [vmem:[%s334 + $0x44] sm:$0xf]
        %v440 = vld [vmem:[%s334 + $0x48] sm:$0xff]
        %v441 = vld [vmem:[%s334 + $0x50] sm:$0xf]
        %v442 = vld [vmem:[%s334 + $0x54] sm:$0xff]
        %v443 = vld [vmem:[%s334 + $0x5c] sm:$0xf]
        %v444 = vld [vmem:[%s334 + $0x60] sm:$0xff]
        %v445 = vld [vmem:[%s334 + $0x68] sm:$0xf]
        %v446 = vld [vmem:[%s334 + $0x6c] sm:$0xff]
        %v447 = vld [vmem:[%s334 + $0x74] sm:$0xf]
        %v448 = vld [vmem:[%s334 + $0x78] sm:$0xff]
        %v449 = vld [vmem:[%s334 + $0x80] sm:$0xf]
        %v450 = vld [vmem:[%s334 + $0x84] sm:$0xff]
        %v451 = vld [vmem:[%s334 + $0x8c] sm:$0xf]
        %v452 = vld [vmem:[%s334 + $0x90] sm:$0xff]
        %v453 = vld [vmem:[%s334 + $0x98] sm:$0xf]
        %v454 = vld [vmem:[%s334 + $0x9c] sm:$0xff]
        %v455 = vld [vmem:[%s334 + $0xa4] sm:$0xf]
        %v456 = vld [vmem:[%s334 + $0xa8] sm:$0xff]
        %v457 = vld [vmem:[%s334 + $0xb0] sm:$0xf]
        %v458 = vld [vmem:[%s334 + $0xb4] sm:$0xff]
        %v459 = vld [vmem:[%s334 + $0xbc] sm:$0xf]
        %v460 = vld [vmem:[%s334 + $0xc0] sm:$0xff]
        %v461 = vld [vmem:[%s334 + $0xc8] sm:$0xf]
        %v462 = vld [vmem:[%s334 + $0xcc] sm:$0xff]
        %v463 = vld [vmem:[%s334 + $0xd4] sm:$0xf]
        %v464 = vld [vmem:[%s334 + $0xd8] sm:$0xff]
        %v465 = vld [vmem:[%s334 + $0xe0] sm:$0xf]
        %v466 = vld [vmem:[%s334 + $0xe4] sm:$0xff]
        %v467 = vld [vmem:[%s334 + $0xec] sm:$0xf]
        %v468 = vld [vmem:[%s334 + $0xf0] sm:$0xff]
        %v469 = vld [vmem:[%s334 + $0xf8] sm:$0xf]
        %v470 = vld [vmem:[%s334 + $0xfc] sm:$0xff]
        %v471 = vld [vmem:[%s334 + $0x104] sm:$0xf]
        %v472 = vld [vmem:[%s334 + $0x108] sm:$0xff]
        %v473 = vld [vmem:[%s334 + $0x110] sm:$0xf]
        %v474 = vld [vmem:[%s334 + $0x114] sm:$0xff]
        %v475 = vld [vmem:[%s334 + $0x11c] sm:$0xf]
        %v476 = vld [vmem:[%s334 + $0x120] sm:$0xff]
        %v477 = vld [vmem:[%s334 + $0x128] sm:$0xf]
        %v478 = vld [vmem:[%s334 + $0x12c] sm:$0xff]
        %v479 = vld [vmem:[%s334 + $0x134] sm:$0xf]
        %v480 = vld [vmem:[%s334 + $0x138] sm:$0xff]
        %v481 = vld [vmem:[%s334 + $0x140] sm:$0xf]
        %v482 = vld [vmem:[%s334 + $0x144] sm:$0xff]
        %v483 = vld [vmem:[%s334 + $0x14c] sm:$0xf]
        %v484 = vld [vmem:[%s334 + $0x150] sm:$0xff]
        %v485 = vld [vmem:[%s334 + $0x158] sm:$0xf]
        %v486 = vld [vmem:[%s334 + $0x15c] sm:$0xff]
        %v487 = vld [vmem:[%s334 + $0x164] sm:$0xf]
        %v488 = vld [vmem:[%s334 + $0x168] sm:$0xff]
        %v489 = vld [vmem:[%s334 + $0x170] sm:$0xf]
        %v490 = vld [vmem:[%s334 + $0x174] sm:$0xff]
        %v491 = vld [vmem:[%s334 + $0x17c] sm:$0xf]
        %v493 = vunpack.c.l.b16 %v427
        %v494 = vunpack.c.h.b16 %v427
        %v495 = vpack.c.b16 %v493, %v493
        %v496 = vpack.c.b16 %v494, %v494
        %v563 = vunpack.c.l.b16 %v428
        %v564 = vunpack.c.h.b16 %v428
        %v565 = vunpack.c.l.b16 %v429
        %v566 = vunpack.c.l.b16 %v430
        %v567 = vunpack.c.h.b16 %v430
        %v568 = vunpack.c.l.b16 %v431
        %v569 = vunpack.c.l.b16 %v432
        %v570 = vunpack.c.h.b16 %v432
        %v571 = vunpack.c.l.b16 %v433
        %v572 = vunpack.c.l.b16 %v434
        %v573 = vunpack.c.h.b16 %v434
        %v574 = vunpack.c.l.b16 %v435
        %v575 = vunpack.c.l.b16 %v436
        %v576 = vunpack.c.h.b16 %v436
        %v577 = vunpack.c.l.b16 %v437
        %v578 = vunpack.c.l.b16 %v438
        %v579 = vunpack.c.h.b16 %v438
        %v580 = vunpack.c.l.b16 %v439
        %v581 = vunpack.c.l.b16 %v440
        %v582 = vunpack.c.h.b16 %v440
        %v583 = vunpack.c.l.b16 %v441
        %v584 = vunpack.c.l.b16 %v442
        %v585 = vunpack.c.h.b16 %v442
        %v586 = vunpack.c.l.b16 %v443
        %v587 = vunpack.c.l.b16 %v444
        %v588 = vunpack.c.h.b16 %v444
        %v589 = vunpack.c.l.b16 %v445
        %v590 = vunpack.c.l.b16 %v446
        %v591 = vunpack.c.h.b16 %v446
        %v592 = vunpack.c.l.b16 %v447
        %v593 = vunpack.c.l.b16 %v448
        %v594 = vunpack.c.h.b16 %v448
        %v595 = vunpack.c.l.b16 %v449
        %v596 = vunpack.c.l.b16 %v450
        %v597 = vunpack.c.h.b16 %v450
        %v598 = vunpack.c.l.b16 %v451
        %v599 = vunpack.c.l.b16 %v452
        %v600 = vunpack.c.h.b16 %v452
        %v601 = vunpack.c.l.b16 %v453
        %v602 = vunpack.c.l.b16 %v454
        %v603 = vunpack.c.h.b16 %v454
        %v604 = vunpack.c.l.b16 %v455
        %v605 = vunpack.c.l.b16 %v456
        %v606 = vunpack.c.h.b16 %v456
        %v607 = vunpack.c.l.b16 %v457
        %v608 = vunpack.c.l.b16 %v458
        %v609 = vunpack.c.h.b16 %v458
        %v610 = vunpack.c.l.b16 %v459
        %v611 = vunpack.c.l.b16 %v460
        %v612 = vunpack.c.h.b16 %v460
        %v613 = vunpack.c.l.b16 %v461
        %v614 = vunpack.c.l.b16 %v462
        %v615 = vunpack.c.h.b16 %v462
        %v616 = vunpack.c.l.b16 %v463
        %v617 = vunpack.c.l.b16 %v464
        %v618 = vunpack.c.h.b16 %v464
        %v619 = vunpack.c.l.b16 %v465
        %v620 = vunpack.c.l.b16 %v466
        %v621 = vunpack.c.h.b16 %v466
        %v622 = vunpack.c.l.b16 %v467
        %v623 = vunpack.c.l.b16 %v468
        %v624 = vunpack.c.h.b16 %v468
        %v625 = vunpack.c.l.b16 %v469
        %v626 = vunpack.c.l.b16 %v470
        %v627 = vunpack.c.h.b16 %v470
        %v628 = vunpack.c.l.b16 %v471
        %v629 = vunpack.c.l.b16 %v472
        %v630 = vunpack.c.h.b16 %v472
        %v631 = vunpack.c.l.b16 %v473
        %v632 = vunpack.c.l.b16 %v474
        %v633 = vunpack.c.h.b16 %v474
        %v634 = vunpack.c.l.b16 %v475
        %v635 = vunpack.c.l.b16 %v476
        %v636 = vunpack.c.h.b16 %v476
        %v637 = vunpack.c.l.b16 %v477
        %v638 = vunpack.c.l.b16 %v478
        %v639 = vunpack.c.h.b16 %v478
        %v640 = vunpack.c.l.b16 %v479
        %v641 = vunpack.c.l.b16 %v480
        %v642 = vunpack.c.h.b16 %v480
        %v643 = vunpack.c.l.b16 %v481
        %v644 = vunpack.c.l.b16 %v482
        %v645 = vunpack.c.h.b16 %v482
        %v646 = vunpack.c.l.b16 %v483
        %v647 = vunpack.c.l.b16 %v484
        %v648 = vunpack.c.h.b16 %v484
        %v649 = vunpack.c.l.b16 %v485
        %v650 = vunpack.c.l.b16 %v486
        %v651 = vunpack.c.h.b16 %v486
        %v652 = vunpack.c.l.b16 %v487
        %v653 = vunpack.c.l.b16 %v488
        %v654 = vunpack.c.h.b16 %v488
        %v655 = vunpack.c.l.b16 %v489
        %v656 = vunpack.c.l.b16 %v490
        %v657 = vunpack.c.h.b16 %v490
        %v658 = vunpack.c.l.b16 %v491
        %v659 = vpack.c.b16 %v566, %v563
        %v660 = vpack.c.b16 %v567, %v564
        %v661 = vpack.c.b16 %v568, %v565
        %v662 = vpack.c.b16 %v572, %v569
        %v663 = vpack.c.b16 %v573, %v570
        %v664 = vpack.c.b16 %v574, %v571
        %v665 = vpack.c.b16 %v578, %v575
        %v666 = vpack.c.b16 %v579, %v576
        %v667 = vpack.c.b16 %v580, %v577
        %v668 = vpack.c.b16 %v584, %v581
        %v669 = vpack.c.b16 %v585, %v582
        %v670 = vpack.c.b16 %v586, %v583
        %v671 = vpack.c.b16 %v590, %v587
        %v672 = vpack.c.b16 %v591, %v588
        %v673 = vpack.c.b16 %v592, %v589
        %v674 = vpack.c.b16 %v596, %v593
        %v675 = vpack.c.b16 %v597, %v594
        %v676 = vpack.c.b16 %v598, %v595
        %v677 = vpack.c.b16 %v602, %v599
        %v678 = vpack.c.b16 %v603, %v600
        %v679 = vpack.c.b16 %v604, %v601
        %v680 = vpack.c.b16 %v608, %v605
        %v681 = vpack.c.b16 %v609, %v606
        %v682 = vpack.c.b16 %v610, %v607
        %v683 = vpack.c.b16 %v614, %v611
        %v684 = vpack.c.b16 %v615, %v612
        %v685 = vpack.c.b16 %v616, %v613
        %v686 = vpack.c.b16 %v620, %v617
        %v687 = vpack.c.b16 %v621, %v618
        %v688 = vpack.c.b16 %v622, %v619
        %v689 = vpack.c.b16 %v626, %v623
        %v690 = vpack.c.b16 %v627, %v624
        %v691 = vpack.c.b16 %v628, %v625
        %v692 = vpack.c.b16 %v632, %v629
        %v693 = vpack.c.b16 %v633, %v630
        %v694 = vpack.c.b16 %v634, %v631
        %v695 = vpack.c.b16 %v638, %v635
        %v696 = vpack.c.b16 %v639, %v636
        %v697 = vpack.c.b16 %v640, %v637
        %v698 = vpack.c.b16 %v644, %v641
        %v699 = vpack.c.b16 %v645, %v642
        %v700 = vpack.c.b16 %v646, %v643
        %v701 = vpack.c.b16 %v650, %v647
        %v702 = vpack.c.b16 %v651, %v648
        %v703 = vpack.c.b16 %v652, %v649
        %v704 = vpack.c.b16 %v656, %v653
        %v705 = vpack.c.b16 %v657, %v654
        %v706 = vpack.c.b16 %v658, %v655
        %755 = vmatprep.subr.bf16.mxu0 %v681
        %756 = vmatpush1.bf16.msra.mxu0 %v680
        %757 = vmatprep.subr.bf16.mxu0 %v678
        %758 = vmatpush1.bf16.msra.mxu0 %v677
        %759 = vmatprep.subr.bf16.mxu0 %v675
        %760 = vmatpush1.bf16.msra.mxu0 %v674
        %761 = vmatprep.subr.bf16.mxu0 %v672
        %762 = vmatpush1.bf16.msra.mxu0 %v671
        %763 = vmatprep.subr.bf16.mxu0 %v669
        %764 = vmatpush1.bf16.msra.mxu0 %v668
        %765 = vmatprep.subr.bf16.mxu0 %v666
        %766 = vmatpush1.bf16.msra.mxu0 %v665
        %767 = vmatprep.subr.bf16.mxu0 %v663
        %768 = vmatpush1.bf16.msra.mxu0 %v662
        %769 = vmatprep.subr.bf16.mxu0 %v660
        %770 = vmatpush1.bf16.msra.mxu0 %v659
        %771 = vmatprep.subr.bf16.mxu0 %v705
        %772 = vmatpush2.bf16.msra.mxu0 %v704
        %773 = vmatprep.subr.bf16.mxu0 %v702
        %774 = vmatpush2.bf16.msra.mxu0 %v701
        %775 = vmatprep.subr.bf16.mxu0 %v699
        %776 = vmatpush2.bf16.msra.mxu0 %v698
        %777 = vmatprep.subr.bf16.mxu0 %v696
        %778 = vmatpush2.bf16.msra.mxu0 %v695
        %779 = vmatprep.subr.bf16.mxu0 %v693
        %780 = vmatpush2.bf16.msra.mxu0 %v692
        %781 = vmatprep.subr.bf16.mxu0 %v690
        %782 = vmatpush2.bf16.msra.mxu0 %v689
        %783 = vmatprep.subr.bf16.mxu0 %v687
        %784 = vmatpush2.bf16.msra.mxu0 %v686
        %785 = vmatprep.subr.bf16.mxu0 %v684
        %786 = vmatpush2.bf16.msra.mxu0 %v683
        %787 = vmatprep.mubr.bf16.mxu0 %v496
        %788 = vmatmul.mubr.bf16.gmra.mxu0 %v495
        %v789 = vpop.f32.mrf.mxu0
        %v790 = vadd.f32 0.0, %v789
        %v791 = vpop.f32.mrf.mxu0
        %v792 = vadd.f32 0.0, %v791
        %v793 = vpop.f32.mrf.mxu0
        %v794 = vpop.f32.mrf.mxu0
        %795 = vdwg.mxu0
        %796 = vmatprep.subr.bf16.mxu0 0
        %797 = vmatpush1.bf16.msra.mxu0 %v682
        %798 = vmatprep.subr.bf16.mxu0 0
        %799 = vmatpush1.bf16.msra.mxu0 %v679
        %800 = vmatprep.subr.bf16.mxu0 0
        %801 = vmatpush1.bf16.msra.mxu0 %v676
        %802 = vmatprep.subr.bf16.mxu0 0
        %803 = vmatpush1.bf16.msra.mxu0 %v673
        %804 = vmatprep.subr.bf16.mxu0 0
        %805 = vmatpush1.bf16.msra.mxu0 %v670
        %806 = vmatprep.subr.bf16.mxu0 0
        %807 = vmatpush1.bf16.msra.mxu0 %v667
        %808 = vmatprep.subr.bf16.mxu0 0
        %809 = vmatpush1.bf16.msra.mxu0 %v664
        %810 = vmatprep.subr.bf16.mxu0 0
        %811 = vmatpush1.bf16.msra.mxu0 %v661
        %812 = vmatprep.subr.bf16.mxu0 0
        %813 = vmatpush2.bf16.msra.mxu0 %v706
        %814 = vmatprep.subr.bf16.mxu0 0
        %815 = vmatpush2.bf16.msra.mxu0 %v703
        %816 = vmatprep.subr.bf16.mxu0 0
        %817 = vmatpush2.bf16.msra.mxu0 %v700
        %818 = vmatprep.subr.bf16.mxu0 0
        %819 = vmatpush2.bf16.msra.mxu0 %v697
        %820 = vmatprep.subr.bf16.mxu0 0
        %821 = vmatpush2.bf16.msra.mxu0 %v694
        %822 = vmatprep.subr.bf16.mxu0 0
        %823 = vmatpush2.bf16.msra.mxu0 %v691
        %824 = vmatprep.subr.bf16.mxu0 0
        %825 = vmatpush2.bf16.msra.mxu0 %v688
        %826 = vmatprep.subr.bf16.mxu0 0
        %827 = vmatpush2.bf16.msra.mxu0 %v685
        %828 = vmatprep.mubr.bf16.mxu0 %v496
        %829 = vmatmul.mubr.bf16.gmra.mxu0 %v495
        %v830 = vpop.f32.mrf.mxu0
        %v831 = vadd.f32 0.0, %v830
        %v832 = vpop.f32.mrf.mxu0
        %v833 = vpop.f32.mrf.mxu0
        %v834 = vpop.f32.mrf.mxu0
        %835 = vdwg.mxu0
        %v836 = vld [vmem:[#allocation6] sm:$0xff]
        %v837 = vld [vmem:[#allocation8] sm:$0xff]
        %v838 = vmul.f32 %v790, %v836
        %839 = vrot.lane.b32.xlu0 %v790, 64
        %v840 = vpop.permute.xlu0 %839
        %v841 = vmul.f32 %v840, %v837
        %v842 = vadd.f32 %v838, %v841
        %v843 = vmul.f32 %v792, %v836
        %844 = vrot.lane.b32.xlu0 %v792, 64
        %v845 = vpop.permute.xlu0 %844
        %v846 = vmul.f32 %v845, %v837
        %v847 = vadd.f32 %v843, %v846
        %v848 = vpack.c.bf16 %v842, %v842
        %v849 = vpack.c.bf16 %v847, %v847
        %850 = vmatprep.subr.bf16.mxu0 0
        %851 = vmatpush1.bf16.xpose.msra.mxu0 0
        %852 = vmatprep.subr.bf16.mxu0 0
        %853 = vmatpush1.bf16.xpose.msra.mxu0 0
        %854 = vmatprep.subr.bf16.mxu0 0
        %855 = vmatpush1.bf16.xpose.msra.mxu0 0
        %856 = vmatprep.subr.bf16.mxu0 0
        %857 = vmatpush1.bf16.xpose.msra.mxu0 0
        %858 = vmatprep.subr.bf16.mxu0 0
        %859 = vmatpush1.bf16.xpose.msra.mxu0 0
        %860 = vmatprep.subr.bf16.mxu0 0
        %861 = vmatpush1.bf16.xpose.msra.mxu0 0
        %862 = vmatprep.subr.bf16.mxu0 0
        %863 = vmatpush1.bf16.xpose.msra.mxu0 0
        %864 = vmatprep.subr.bf16.mxu0 0
        %865 = vmatpush1.bf16.xpose.msra.mxu0 %v849
        %866 = vmatprep.subr.bf16.mxu0 0
        %867 = vmatpush2.bf16.xpose.msra.mxu0 0
        %868 = vmatprep.subr.bf16.mxu0 0
        %869 = vmatpush2.bf16.xpose.msra.mxu0 0
        %870 = vmatprep.subr.bf16.mxu0 0
        %871 = vmatpush2.bf16.xpose.msra.mxu0 0
        %872 = vmatprep.subr.bf16.mxu0 0
        %873 = vmatpush2.bf16.xpose.msra.mxu0 0
        %874 = vmatprep.subr.bf16.mxu0 0
        %875 = vmatpush2.bf16.xpose.msra.mxu0 0
        %876 = vmatprep.subr.bf16.mxu0 0
        %877 = vmatpush2.bf16.xpose.msra.mxu0 0
        %878 = vmatprep.subr.bf16.mxu0 0
        %879 = vmatpush2.bf16.xpose.msra.mxu0 0
        %880 = vmatprep.subr.bf16.mxu0 0
        %881 = vmatpush2.bf16.xpose.msra.mxu0 0
        %882 = vmatprep.mubr.bf16.mxu0 0
        %883 = vmatmul.mubr.bf16.gmra.mxu0 %v848
        %v884 = vpop.f32.mrf.mxu0
        %v885 = vadd.f32 0.0, %v884
        %v886 = vpop.f32.mrf.mxu0
        %v887 = vpop.f32.mrf.mxu0
        %v888 = vpop.f32.mrf.mxu0
        %889 = vdwg.mxu0
        %v890 = vlaneseq
        %v891 = vshrl.u32 %v890, 7
        %v892 = vlaneseq
        %v893 = vand.u32 %v892, 127
        %vm894 = vcmp.le.s32.totalorder %v893, %v891
        %v895 = vsel %vm894, %v885, -1e+30
        %vm896 = vcmask 64512
        %v897 = vsel %vm896, %v895, -inf
        %898 = vmax.xlane.f32.xlu0 %v897
        %v899 = vpop.xlane.xlu0 %898
        %v900 = vsub.f32 %v895, %v899
        %v901 = vmul.f32 %v900, 1.442695
        %v902 = vpow.pop %v901
        %v903 = vsel %vm896, %v902, 0.0
        %904 = vadd.xlane.f32.xlu0 %v903
        %v905 = vpop.xlane.xlu0 %904
        %v906 = vpack.c.bf16 %v902, %v902
        %v907 = vpack.c.bf16 %v831, %v831
        %v909 = vsel %vm896, %v906, 0
        %vm911 = vcmask 1043456
        %v913 = vsel %vm911, %v907, 0
        %915 = vmatprep.subr.bf16.mxu0 0
        %916 = vmatpush1.bf16.msra.mxu0 0
        %917 = vmatprep.subr.bf16.mxu0 0
        %918 = vmatpush1.bf16.msra.mxu0 0
        %919 = vmatprep.subr.bf16.mxu0 0
        %920 = vmatpush1.bf16.msra.mxu0 0
        %921 = vmatprep.subr.bf16.mxu0 0
        %922 = vmatpush1.bf16.msra.mxu0 0
        %923 = vmatprep.subr.bf16.mxu0 0
        %924 = vmatpush1.bf16.msra.mxu0 0
        %925 = vmatprep.subr.bf16.mxu0 0
        %926 = vmatpush1.bf16.msra.mxu0 0
        %927 = vmatprep.subr.bf16.mxu0 0
        %928 = vmatpush1.bf16.msra.mxu0 0
        %929 = vmatprep.subr.bf16.mxu0 0
        %930 = vmatpush1.bf16.msra.mxu0 %v913
        %931 = vmatprep.subr.bf16.mxu0 0
        %932 = vmatpush2.bf16.msra.mxu0 0
        %933 = vmatprep.subr.bf16.mxu0 0
        %934 = vmatpush2.bf16.msra.mxu0 0
        %935 = vmatprep.subr.bf16.mxu0 0
        %936 = vmatpush2.bf16.msra.mxu0 0
        %937 = vmatprep.subr.bf16.mxu0 0
        %938 = vmatpush2.bf16.msra.mxu0 0
        %939 = vmatprep.subr.bf16.mxu0 0
        %940 = vmatpush2.bf16.msra.mxu0 0
        %941 = vmatprep.subr.bf16.mxu0 0
        %942 = vmatpush2.bf16.msra.mxu0 0
        %943 = vmatprep.subr.bf16.mxu0 0
        %944 = vmatpush2.bf16.msra.mxu0 0
        %945 = vmatprep.subr.bf16.mxu0 0
        %946 = vmatpush2.bf16.msra.mxu0 0
        %947 = vmatprep.mubr.bf16.mxu0 0
        %948 = vmatmul.mubr.bf16.gmra.mxu0 %v909
        %v949 = vpop.f32.mrf.mxu0
        %v950 = vadd.f32 0.0, %v949
        %v951 = vpop.f32.mrf.mxu0
        %v952 = vpop.f32.mrf.mxu0
        %v953 = vpop.f32.mrf.mxu0
        %954 = vdwg.mxu0
        %v955 = vrcp.pop %v905
        %v956 = vmul.f32 %v950, %v955
        %v957 = vld [vmem:[%s381] sm:$0xff]
        %v958 = vld [vmem:[%s381 + $0x8] sm:$0xff]
        %v959 = vpack.c.bf16 %v956, %v956
        %v960 = vld [vmem:[%s343] sm:$0xff]
        %v961 = vld [vmem:[%s343 + $0x8] sm:$0xff]
        %v962 = vld [vmem:[%s343 + $0x10] sm:$0xff]
        %v963 = vld [vmem:[%s343 + $0x18] sm:$0xff]
        %v964 = vld [vmem:[%s343 + $0x20] sm:$0xff]
        %v965 = vld [vmem:[%s343 + $0x28] sm:$0xff]
        %v966 = vld [vmem:[%s343 + $0x30] sm:$0xff]
        %v967 = vld [vmem:[%s343 + $0x38] sm:$0xff]
        %v968 = vld [vmem:[%s343 + $0x40] sm:$0xff]
        %v969 = vld [vmem:[%s343 + $0x48] sm:$0xff]
        %v970 = vld [vmem:[%s343 + $0x50] sm:$0xff]
        %v971 = vld [vmem:[%s343 + $0x58] sm:$0xff]
        %v972 = vld [vmem:[%s343 + $0x60] sm:$0xff]
        %v973 = vld [vmem:[%s343 + $0x68] sm:$0xff]
        %v974 = vld [vmem:[%s343 + $0x70] sm:$0xff]
        %v975 = vld [vmem:[%s343 + $0x78] sm:$0xff]
        %v992 = vunpack.c.l.b16 %v960
        %v993 = vunpack.c.h.b16 %v960
        %v994 = vunpack.c.l.b16 %v961
        %v995 = vunpack.c.h.b16 %v961
        %v996 = vunpack.c.l.b16 %v962
        %v997 = vunpack.c.h.b16 %v962
        %v998 = vunpack.c.l.b16 %v963
        %v999 = vunpack.c.h.b16 %v963
        %v1000 = vunpack.c.l.b16 %v964
        %v1001 = vunpack.c.h.b16 %v964
        %v1002 = vunpack.c.l.b16 %v965
        %v1003 = vunpack.c.h.b16 %v965
        %v1004 = vunpack.c.l.b16 %v966
        %v1005 = vunpack.c.h.b16 %v966
        %v1006 = vunpack.c.l.b16 %v967
        %v1007 = vunpack.c.h.b16 %v967
        %v1008 = vunpack.c.l.b16 %v968
        %v1009 = vunpack.c.h.b16 %v968
        %v1010 = vunpack.c.l.b16 %v969
        %v1011 = vunpack.c.h.b16 %v969
        %v1012 = vunpack.c.l.b16 %v970
        %v1013 = vunpack.c.h.b16 %v970
        %v1014 = vunpack.c.l.b16 %v971
        %v1015 = vunpack.c.h.b16 %v971
        %v1016 = vunpack.c.l.b16 %v972
        %v1017 = vunpack.c.h.b16 %v972
        %v1018 = vunpack.c.l.b16 %v973
        %v1019 = vunpack.c.h.b16 %v973
        %v1020 = vunpack.c.l.b16 %v974
        %v1021 = vunpack.c.h.b16 %v974
        %v1022 = vunpack.c.l.b16 %v975
        %v1023 = vunpack.c.h.b16 %v975
        %v1024 = vpack.c.b16 %v994, %v992
        %v1025 = vpack.c.b16 %v995, %v993
        %v1026 = vpack.c.b16 %v998, %v996
        %v1027 = vpack.c.b16 %v999, %v997
        %v1028 = vpack.c.b16 %v1002, %v1000
        %v1029 = vpack.c.b16 %v1003, %v1001
        %v1030 = vpack.c.b16 %v1006, %v1004
        %v1031 = vpack.c.b16 %v1007, %v1005
        %v1032 = vpack.c.b16 %v1010, %v1008
        %v1033 = vpack.c.b16 %v1011, %v1009
        %v1034 = vpack.c.b16 %v1014, %v1012
        %v1035 = vpack.c.b16 %v1015, %v1013
        %v1036 = vpack.c.b16 %v1018, %v1016
        %v1037 = vpack.c.b16 %v1019, %v1017
        %v1038 = vpack.c.b16 %v1022, %v1020
        %v1039 = vpack.c.b16 %v1023, %v1021
        %1056 = vmatprep.subr.bf16.mxu0 %v1039
        %1057 = vmatpush1.bf16.msra.mxu0 %v1038
        %1058 = vmatprep.subr.bf16.mxu0 %v1037
        %1059 = vmatpush1.bf16.msra.mxu0 %v1036
        %1060 = vmatprep.subr.bf16.mxu0 %v1035
        %1061 = vmatpush1.bf16.msra.mxu0 %v1034
        %1062 = vmatprep.subr.bf16.mxu0 %v1033
        %1063 = vmatpush1.bf16.msra.mxu0 %v1032
        %1064 = vmatprep.subr.bf16.mxu0 %v1031
        %1065 = vmatpush1.bf16.msra.mxu0 %v1030
        %1066 = vmatprep.subr.bf16.mxu0 %v1029
        %1067 = vmatpush1.bf16.msra.mxu0 %v1028
        %1068 = vmatprep.subr.bf16.mxu0 %v1027
        %1069 = vmatpush1.bf16.msra.mxu0 %v1026
        %1070 = vmatprep.subr.bf16.mxu0 %v1025
        %1071 = vmatpush1.bf16.msra.mxu0 %v1024
        %1072 = vmatprep.subr.bf16.mxu0 0
        %1073 = vmatpush2.bf16.msra.mxu0 0
        %1074 = vmatprep.subr.bf16.mxu0 0
        %1075 = vmatpush2.bf16.msra.mxu0 0
        %1076 = vmatprep.subr.bf16.mxu0 0
        %1077 = vmatpush2.bf16.msra.mxu0 0
        %1078 = vmatprep.subr.bf16.mxu0 0
        %1079 = vmatpush2.bf16.msra.mxu0 0
        %1080 = vmatprep.subr.bf16.mxu0 0
        %1081 = vmatpush2.bf16.msra.mxu0 0
        %1082 = vmatprep.subr.bf16.mxu0 0
        %1083 = vmatpush2.bf16.msra.mxu0 0
        %1084 = vmatprep.subr.bf16.mxu0 0
        %1085 = vmatpush2.bf16.msra.mxu0 0
        %1086 = vmatprep.subr.bf16.mxu0 0
        %1087 = vmatpush2.bf16.msra.mxu0 0
        %1088 = vmatprep.mubr.bf16.mxu0 0
        %1089 = vmatmul.mubr.bf16.gmra.mxu0 %v959
        %v1090 = vpop.f32.mrf.mxu0
        %v1091 = vadd.f32 0.0, %v1090
        %v1092 = vpop.f32.mrf.mxu0
        %v1093 = vadd.f32 0.0, %v1092
        %v1094 = vpop.f32.mrf.mxu0
        %v1095 = vpop.f32.mrf.mxu0
        %1096 = vdwg.mxu0
        %v1097 = vadd.f32 %v957, %v1091
        %v1098 = vadd.f32 %v958, %v1093
        %1099 = vst [vmem:[%s381] sm:$0xff] %v1097
        %1100 = vst [vmem:[%s381 + $0x8] sm:$0xff] %v1098
        %s1101 = sand.u32 %s188, 1
        %s1102 = scalar_lea.sflag [#allocation5], %s1101
        %s1103 = sand.u32 %s188, 1
        %s1104 = smul.addr %s1103, 16
        %s1105 = scalar_lea.vmem [#allocation12], %s1104
        // Predicated region
        $region69: #{tpu_custom_call.1} parent=43 // pred_check
          %p1106 = pneg %p198
        $region70: #{tpu_custom_call.1} parent=43 // pred_check_branch
          %1108 = sbr.rel (%p1106) target = $region72
        $region71: #{tpu_custom_call.1} parent=43 // pred_region
          %s1110 = ssub.s32 256, 256
          %1111 = vsyncadd %s1102, %s1110
          %s1112 = smul.addr %s31, 2
          %s1113 = smul.addr %s1112, 128
          %s1114 = scalar_lea.hbm %s6, %s1113
          %s1116 = sshll.u32 %s1105, 4
          %s1117 = int_to_ptr.vmem [resolvable:$true] %s1116
          %1119 = dma.vmem_to_hbm [thread:$0]  %s1117, 256, %s1114, %s1102
        $region72: #{tpu_custom_call.1} parent=43 // pred_fallthru
          _
      $region44: #{tpu_custom_call.1} parent=5 // pred_fallthru
        _
      %p1120 = scmp.le.s32.totalorder 2, %s22
      // Predicated region
      $region73: #{tpu_custom_call.1} parent=5 // pred_check
        %p1121 = pneg %p1120
      $region74: #{tpu_custom_call.1} parent=5 // pred_check_branch
        %1123 = sbr.rel (%p1121) target = $region76
      $region75: #{tpu_custom_call.1} parent=5 // pred_region
        %s1124 = ssub.s32 %s22, 2
        // Predicated region
        $region77: #{tpu_custom_call.1} parent=75 // pred_check
          %p1125 = pneg %p204
        $region78: #{tpu_custom_call.1} parent=75 // pred_check_branch
          %1127 = sbr.rel (%p1125) target = $region80
        $region79: #{tpu_custom_call.1} parent=75 // pred_region
          %s1128 = sand.u32 %s189, 1
          %s1129 = scalar_lea.sflag [#allocation5], %s1128
          %s1130 = sand.u32 %s189, 1
          %s1131 = smul.addr %s1130, 16
          %s1132 = scalar_lea.vmem [#allocation12], %s1131
          %1133 = dma.done %s1129, 256
        $region80: #{tpu_custom_call.1} parent=75 // pred_fallthru
          _
      $region76: #{tpu_custom_call.1} parent=5 // pred_fallthru
        _
    $region6: #{tpu_custom_call.1} parent=1 // loop_footer
      %s26 = sadd.s32 1, %s22
    $region7: #{tpu_custom_call.1} parent=1 // loop_footer_branch
      %21 = sbr.rel target = $region3
    $region8: #{tpu_custom_call.1} parent=1 // loop_exit
      _
    %1134 = vsyncpa [#allocation4], 1
    %s1135 = scalar_lea.sflag [#allocation4], 1
    %1136 = vsyncpa %s1135, 1
    %1137 = vsyncpa [#allocation7], 1
    %1138 = vsyncpa [#allocation10], 1
    %s1139 = scalar_lea.sflag [#allocation10], 1
    %1140 = vsyncpa %s1139, 1
    %1141 = vsyncpa [#allocation5], 1
    %s1142 = scalar_lea.sflag [#allocation5], 1
    %1143 = vsyncpa %s1142, 1

</llo_original>
